<compile_context>
chip_gen: v6e
topology: v6e:2x2x1
jax: 0.10.0
libtpu: 0.0.40
codegen_flags: <defaults>
</compile_context>

<pallas_src>
import functools

import numpy as np
import jax
import jax.numpy as jnp
from jax.experimental import pallas as pl
from jax.experimental.pallas import tpu as pltpu

LRELU_SLOPE = 0.2


def _round_up(v, m):
    return ((v + m - 1) // m) * m


# ------------------------------ Pallas kernels ------------------------------

def _direct_gc_kernel(KH, KW, dil, TR, Wo, Cin, Cout, Coutp, act,
                      xp_ref, w_ref, b_ref, o_ref):
    """Fused stride-1 gated conv: KHxKW shifted matmuls + gate epilogue."""
    row0 = pl.program_id(1) * TR
    acc = jnp.zeros((TR * Wo, 2 * Coutp), jnp.float32)
    for idx in range(KH * KW):
        i, j = divmod(idx, KW)
        xs = xp_ref[pl.ds(row0 + i * dil, TR), j * dil:j * dil + Wo, :]
        acc = acc + jnp.dot(xs.reshape(TR * Wo, Cin), w_ref[idx],
                            preferred_element_type=jnp.float32)
    acc = acc + b_ref[...]
    feat = acc[:, :Coutp]
    gate = jax.nn.sigmoid(acc[:, Coutp:])
    if act == "lrelu":
        feat = jnp.where(feat >= 0, feat, LRELU_SLOPE * feat)
    elif act == "tanh":
        feat = jnp.tanh(feat)
    out = (feat * gate)[:, :Cout]
    o_ref[...] = out.reshape(TR, Wo, Cout).astype(o_ref.dtype)


@functools.lru_cache(maxsize=None)
def _direct_gc_call(N, Hp, Wp, Cin, k, dil, TR, Ho, Wo, Cout, Coutp, act, out_dtype):
    kernel = functools.partial(_direct_gc_kernel, k, k, dil, TR, Wo,
                               Cin, Cout, Coutp, act)
    call = pl.pallas_call(
        kernel,
        out_shape=jax.ShapeDtypeStruct((N, Ho, Wo, Cout), out_dtype),
        grid=(N, Ho // TR),
        in_specs=[
            # padded activation slab for batch n, resident across the row grid
            pl.BlockSpec((None, Hp, Wp, Cin), lambda n, r: (n, 0, 0, 0)),
            # fused (feature|mask) weights, grid-invariant
            pl.BlockSpec((k * k, Cin, 2 * Coutp), lambda n, r: (0, 0, 0)),
            pl.BlockSpec((1, 2 * Coutp), lambda n, r: (0, 0)),
        ],
        out_specs=pl.BlockSpec((None, TR, Wo, Cout), lambda n, r: (n, r, 0, 0)),
        compiler_params=pltpu.CompilerParams(
            dimension_semantics=("parallel", "parallel")),
    )
    return jax.jit(call)


def _im2col_gc_kernel(Cout, Coutp, act, p_ref, w_ref, b_ref, o_ref):
    """Fused im2col gated conv (used for the two stride-2 layers)."""
    acc = jnp.dot(p_ref[...], w_ref[...],
                  preferred_element_type=jnp.float32) + b_ref[...]
    feat = acc[:, :Coutp]
    gate = jax.nn.sigmoid(acc[:, Coutp:])
    if act == "lrelu":
        feat = jnp.where(feat >= 0, feat, LRELU_SLOPE * feat)
    elif act == "tanh":
        feat = jnp.tanh(feat)
    o_ref[...] = (feat * gate)[:, :Cout].astype(o_ref.dtype)


@functools.lru_cache(maxsize=None)
def _im2col_gc_call(P_pad, TP, Kp, Cout, Coutp, act, out_dtype):
    kernel = functools.partial(_im2col_gc_kernel, Cout, Coutp, act)
    call = pl.pallas_call(
        kernel,
        out_shape=jax.ShapeDtypeStruct((P_pad, Cout), out_dtype),
        grid=(P_pad // TP,),
        in_specs=[
            pl.BlockSpec((TP, Kp), lambda i: (i, 0)),
            pl.BlockSpec((Kp, 2 * Coutp), lambda i: (0, 0)),
            pl.BlockSpec((1, 2 * Coutp), lambda i: (0, 0)),
        ],
        out_specs=pl.BlockSpec((TP, Cout), lambda i: (i, 0)),
        compiler_params=pltpu.CompilerParams(dimension_semantics=("parallel",)),
    )
    return jax.jit(call)


# ------------------------------ JAX glue ops ------------------------------

def to_nhwc(x):
    return jnp.transpose(x, (0, 2, 3, 1))


def to_nchw(x):
    return jnp.transpose(x, (0, 3, 1, 2))


def upsample_nearest_x2(x):
    return jnp.repeat(jnp.repeat(x, 2, axis=1), 2, axis=2)


def gated_conv(x, layer):
    cin, cout, k, s, pad, dil, act, _tr = layer["cfg"]
    coutp = layer["coutp"]
    N, H, W, _ = x.shape
    x = x.astype(jnp.bfloat16)
    out_dtype = jnp.float32 if act == "tanh" else jnp.bfloat16
    Ho = (H + 2 * pad - dil * (k - 1) - 1) // s + 1
    Wo = (W + 2 * pad - dil * (k - 1) - 1) // s + 1
    xp = jnp.pad(x, ((0, 0), (pad, pad), (pad, pad), (0, 0)))

    if s == 1 and Wo % 8 == 0:
        # Direct path: no im2col materialization, padded slab resident in VMEM.
        TR = Ho
        while TR * Wo > 2048 and TR % 2 == 0:   # bound f32 accumulator size
            TR //= 2
        call = _direct_gc_call(N, H + 2 * pad, W + 2 * pad, cin, k, dil,
                               TR, Ho, Wo, cout, coutp, act, out_dtype)
        return call(xp, layer["w_direct"], layer["b"])

    # im2col matmul path (stride != 1).
    cols = []
    for i in range(k):
        for j in range(k):
            hs, ws = i * dil, j * dil
            cols.append(xp[:, hs:hs + (Ho - 1) * s + 1:s,
                           ws:ws + (Wo - 1) * s + 1:s, :])
    K = k * k * cin
    Kp = layer["w_im2col"].shape[0]
    P = N * Ho * Wo
    patches = jnp.concatenate(cols, axis=-1).reshape(P, K)
    if Kp > K:
        patches = jnp.pad(patches, ((0, 0), (0, Kp - K)))
    TP = 2048 if P >= 2048 else _round_up(P, 8)
    P_pad = _round_up(P, TP)
    if P_pad > P:
        patches = jnp.pad(patches, ((0, P_pad - P), (0, 0)))
    call = _im2col_gc_call(P_pad, TP, Kp, cout, coutp, act, out_dtype)
    out = call(patches, layer["w_im2col"], layer["b"])
    return out[:P].reshape(N, Ho, Wo, cout)


# ------------------------------ model definition ------------------------------

def GC(cin, cout, k, s, p, d=1, act="lrelu", tr=False):
    return (cin, cout, k, s, p, d, act, tr)


COARSE_CFG = [
    [GC(4, 32, 5, 2, 2), GC(32, 32, 3, 1, 1), GC(32, 64, 3, 2, 1)],
    [GC(64, 64, 3, 1, 1)] * 3,
    [GC(64, 64, 3, 1, 1)] * 3,
    [GC(64, 64, 3, 1, 2, 2)] * 3,
    [GC(64, 64, 3, 1, 4, 4)] * 3,
    [GC(64, 64, 3, 1, 8, 8)] * 3,
    [GC(64, 64, 3, 1, 16, 16)] * 2,
    [GC(64, 64, 3, 1, 1)] * 3,
    [GC(64, 64, 3, 1, 1, tr=True), GC(64, 32, 3, 1, 1, tr=True),
     GC(32, 3, 3, 1, 1, act="tanh")],       # GatedConv(act='none') + nn.Tanh fused
]


def init_gated_conv_params(key, cin, cout, k):
    k1, k2 = jax.random.split(key)
    scale = 1.0 / np.sqrt(k * k * cin)
    wf = scale * jax.random.normal(k1, (k, k, cin, cout), jnp.float32)
    wm = scale * jax.random.normal(k2, (k, k, cin, cout), jnp.float32)
    bf = jnp.zeros((cout,), jnp.float32)
    bm = jnp.zeros((cout,), jnp.float32)
    return (wf, bf, wm, bm)


def pack_layer(cfg, raw):
    """Fuse feature+mask weights, pad channels so the matmul width is 128k."""
    cin, cout, k, _s, _p, _d, _act, _tr = cfg
    wf, bf, wm, bm = raw
    coutp = _round_up(cout, 64)                      # 2*coutp is a multiple of 128
    pc = coutp - cout
    wf_p = jnp.pad(wf, ((0, 0), (0, 0), (0, 0), (0, pc)))
    wm_p = jnp.pad(wm, ((0, 0), (0, 0), (0, 0), (0, pc)))
    b = jnp.concatenate([jnp.pad(bf, (0, pc)), jnp.pad(bm, (0, pc))])
    b = b.reshape(1, 2 * coutp).astype(jnp.float32)
    # direct-conv form: (tap, Cin, 2*Coutp)
    w_direct = jnp.concatenate([wf_p, wm_p], axis=-1)
    w_direct = w_direct.reshape(k * k, cin, 2 * coutp).astype(jnp.bfloat16)
    # im2col form: (Kp, 2*Coutp), K padded to a multiple of 128
    K = k * k * cin
    Kp = _round_up(K, 128)
    w_flat = jnp.concatenate([wf_p.reshape(K, coutp), wm_p.reshape(K, coutp)],
                             axis=-1)
    w_im2col = jnp.pad(w_flat, ((0, Kp - K), (0, 0))).astype(jnp.bfloat16)
    return {"cfg": cfg, "coutp": coutp, "w_direct": w_direct,
            "w_im2col": w_im2col, "b": b}


def build_params(key):
    counter = [0]

    def nxt():
        counter[0] += 1
        return jax.random.fold_in(key, counter[0])

    return [[pack_layer(cfg, init_gated_conv_params(nxt(), cfg[0], cfg[1], cfg[2]))
             for cfg in blk] for blk in COARSE_CFG]


def run_seq(x, layers):
    for layer in layers:
        if layer["cfg"][7]:                  # TransposeGatedConv2d
            x = upsample_nearest_x2(x)
        x = gated_conv(x, layer)
    return x


def coarse_forward(first_in, params):
    """Coarse.forward: NCHW f32 in, NCHW f32 out (clamped to [0, 1])."""
    x = to_nhwc(first_in)
    x = run_seq(x, params[0])
    for i in range(1, 8):                    # residual blocks coarse2..coarse8
        x = run_seq(x, params[i]) + x
    x = run_seq(x, params[8])                # coarse9 (tanh fused in last conv)
    x = jnp.clip(x.astype(jnp.float32), 0.0, 1.0)
    return to_nchw(x)


# ------------------------------ main ------------------------------

if __name__ == "__main__":
    B, IMG = 2, 32                           # scaled-down opt.imgsize (original 256)

    key = jax.random.PRNGKey(0)
    kp, kx = jax.random.split(key)
    params = build_params(kp)

    first_in = jax.random.uniform(kx, (B, 4, IMG, IMG), jnp.float32)

    out = coarse_forward(first_in, params)
    out = jax.block_until_ready(out)

    assert out.shape == (B, 3, IMG, IMG)
    assert bool(jnp.all(jnp.isfinite(out)))
    assert bool(jnp.all((out >= 0.0) & (out <= 1.0)))
    print("KERNEL_OK")
</pallas_src>

<mosaic_0001>
module attributes {stable_mosaic.version = 11 : i64} {
  func.func @_im2col_gc_kernel(%arg0: i32, %arg1: memref<512x128xbf16, #tpu.memory_space<vmem>>, %arg2: memref<128x128xbf16, #tpu.memory_space<vmem>>, %arg3: memref<1x128xf32, #tpu.memory_space<vmem>>, %arg4: memref<512x32xbf16, #tpu.memory_space<vmem>>) attributes {dimension_semantics = [#tpu.dimension_semantics<parallel>], iteration_bounds = array<i64: 1>, scalar_prefetch = 0 : i64, scratch_operands = 0 : i64, tpu.core_type = #tpu.core_type<tc>, window_params = [{transform_indices = @transform_0, window_bounds = array<i64: 512, 128>}, {pipeline_mode = #tpu.pipeline_mode<synchronous>, transform_indices = @transform_1, window_bounds = array<i64: 128, 128>}, {pipeline_mode = #tpu.pipeline_mode<synchronous>, transform_indices = @transform_2, window_bounds = array<i64: 1, 128>}, {transform_indices = @transform_3, window_bounds = array<i64: 512, 32>}]} {
    %c0 = arith.constant 0 : index
    %c0_0 = arith.constant 0 : index
    %0 = vector.load %arg1[%c0, %c0_0] : memref<512x128xbf16, #tpu.memory_space<vmem>>, vector<512x128xbf16>
    %c0_1 = arith.constant 0 : index
    %c0_2 = arith.constant 0 : index
    %1 = vector.load %arg2[%c0_1, %c0_2] : memref<128x128xbf16, #tpu.memory_space<vmem>>, vector<128x128xbf16>
    %cst = arith.constant dense<0.000000e+00> : vector<512x128xf32>
    %2 = tpu.matmul %0, %1, %cst {dimension_numbers = #tpu.dot_dimension_numbers<[1], [0], [0], [1], [0, 0, 1, 1], [], []>} : vector<512x128xbf16>, vector<128x128xbf16>, vector<512x128xf32> -> vector<512x128xf32>
    %c0_3 = arith.constant 0 : index
    %c0_4 = arith.constant 0 : index
    %3 = vector.load %arg3[%c0_3, %c0_4] : memref<1x128xf32, #tpu.memory_space<vmem>>, vector<1x128xf32>
    %4 = vector.broadcast %3 : vector<1x128xf32> to vector<512x128xf32>
    %5 = arith.addf %2, %4 : vector<512x128xf32>
    %6 = vector.extract_strided_slice %5 {offsets = [0, 0], sizes = [512, 64], strides = [1, 1]} : vector<512x128xf32> to vector<512x64xf32>
    %7 = vector.extract_strided_slice %5 {offsets = [0, 64], sizes = [512, 64], strides = [1, 1]} : vector<512x128xf32> to vector<512x64xf32>
    %8 = arith.negf %7 : vector<512x64xf32>
    %9 = math.exp %8 : vector<512x64xf32>
    %cst_5 = arith.constant 1.000000e+00 : f32
    %10 = vector.broadcast %cst_5 : f32 to vector<512x64xf32>
    %11 = arith.addf %10, %9 : vector<512x64xf32>
    %12 = arith.divf %10, %11 : vector<512x64xf32>
    %cst_6 = arith.constant 0.000000e+00 : f32
    %13 = vector.broadcast %cst_6 : f32 to vector<512x64xf32>
    %14 = arith.cmpf oge, %6, %13 : vector<512x64xf32>
    %cst_7 = arith.constant 2.000000e-01 : f32
    %15 = vector.broadcast %cst_7 : f32 to vector<512x64xf32>
    %16 = arith.mulf %15, %6 : vector<512x64xf32>
    %17 = arith.select %14, %6, %16 : vector<512x64xi1>, vector<512x64xf32>
    %18 = arith.mulf %17, %12 : vector<512x64xf32>
    %19 = vector.extract_strided_slice %18 {offsets = [0, 0], sizes = [512, 32], strides = [1, 1]} : vector<512x64xf32> to vector<512x32xf32>
    %20 = arith.truncf %19 : vector<512x32xf32> to vector<512x32xbf16>
    %c0_8 = arith.constant 0 : index
    %c0_9 = arith.constant 0 : index
    %21 = vector.load %arg4[%c0_8, %c0_9] : memref<512x32xbf16, #tpu.memory_space<vmem>>, vector<512x32xbf16>
    tpu.vector_store %arg4[%c0_8, %c0_9], %20 {strides = array<i32>} : memref<512x32xbf16, #tpu.memory_space<vmem>>, vector<512x32xbf16>,
    return
  }
  func.func @transform_0(%arg0: i32) -> (i32, i32) {
    %c0_i32 = arith.constant 0 : i32
    %c0_i32_0 = arith.constant 0 : i32
    return %arg0, %c0_i32 : i32, i32
  }
  func.func @transform_1(%arg0: i32) -> (i32, i32) {
    %c0_i32 = arith.constant 0 : i32
    %c0_i32_0 = arith.constant 0 : i32
    %c0_i32_1 = arith.constant 0 : i32
    return %c0_i32, %c0_i32_0 : i32, i32
  }
  func.func @transform_2(%arg0: i32) -> (i32, i32) {
    %c0_i32 = arith.constant 0 : i32
    %c0_i32_0 = arith.constant 0 : i32
    %c0_i32_1 = arith.constant 0 : i32
    return %c0_i32, %c0_i32_0 : i32, i32
  }
  func.func @transform_3(%arg0: i32) -> (i32, i32) {
    %c0_i32 = arith.constant 0 : i32
    %c0_i32_0 = arith.constant 0 : i32
    return %arg0, %c0_i32 : i32, i32
  }
}

</mosaic_0001>

<llo_original>
// kernel: tpu_custom_call.1
$region0: #{tpu_custom_call.1}
  #allocation0 [shape = 'u32[]', space=smem, size = 0x4, offset = 0x4, fixed_abs, tag = 'smem constant byte address 0x4 - core index']
  #allocation1 [shape = 'u32[144,128]{1,0:T(1,128)}', space=vmem, size = 0x12000, scoped, tag = 'internal scratch']
  %s0 = inlined_call_operand.hbm [shape: bf16[512,128], index: 0, kind: input, shape index: {}]
  %s1 = inlined_call_operand.hbm [shape: bf16[128,128], index: 1, kind: input, shape index: {}]
  %s2 = inlined_call_operand.vmem [shape: f32[1,128], index: 2, kind: input, shape index: {}]
  %s3 = inlined_call_operand.vmem [shape: bf16[512,32], index: 3, kind: output, shape index: {}]
  %s4 = sld [smem:[#allocation0]]
  $region30: #{tpu_custom_call.1} parent=0
    _
  %s6 = ssub.s32 1, %s4
  %s7 = scalar_select 0, %s6, %s4
  $region1: #{tpu_custom_call.1} parent=0
    #allocation2 [shape = 'u8[131072]{0}', space=vmem, size = 0x20000, scoped, tag = 'input window, operand 0, single buffered']
    #allocation3 [shape = 's32[1]{0}', space=sflag, size = 0x4, scoped, tag = 'scoped memory for tpu_custom_call.1']
    #allocation4 [shape = 'u8[32768]{0}', space=vmem, size = 0x8000, scoped, tag = 'input window, operand 1, single buffered']
    #allocation5 [shape = 's32[1]{0}', space=sflag, size = 0x4, scoped, tag = 'scoped memory for tpu_custom_call.1']
    %8 = vsyncpa [#allocation3], 0
    %9 = vsyncpa [#allocation5], 0
    // Predicated region
    $region2: #{tpu_custom_call.1} parent=1 // pred_check
      _
    $region3: #{tpu_custom_call.1} parent=1 // pred_check_branch
      %11 = sbr.rel (0) target = $region5
    $region4: #{tpu_custom_call.1} parent=1 // pred_region
      %s13 = ssub.s32 4096, 4096
      %14 = vsyncadd [#allocation3], %s13
      %s15 = sshll.u32 [#allocation2], 4
      %s16 = int_to_ptr.vmem [resolvable:$true] %s15
      %21 = dma.hbm_to_vmem [thread:$0]  %s0, 4096, %s16, [#allocation3], 64, 64, 4
    $region5: #{tpu_custom_call.1} parent=1 // pred_fallthru
      _
    // Predicated region
    $region6: #{tpu_custom_call.1} parent=1 // pred_check
      _
    $region7: #{tpu_custom_call.1} parent=1 // pred_check_branch
      %23 = sbr.rel (0) target = $region9
    $region8: #{tpu_custom_call.1} parent=1 // pred_region
      %s25 = ssub.s32 1024, 1024
      %26 = vsyncadd [#allocation5], %s25
      %s27 = sshll.u32 [#allocation4], 4
      %s28 = int_to_ptr.vmem [resolvable:$true] %s27
      %33 = dma.hbm_to_vmem [thread:$0]  %s1, 1024, %s28, [#allocation5], 64, 64, 4
    $region9: #{tpu_custom_call.1} parent=1 // pred_fallthru
      _
    // Predicated region
    $region10: #{tpu_custom_call.1} parent=1 // pred_check
      _
    $region11: #{tpu_custom_call.1} parent=1 // pred_check_branch
      %35 = sbr.rel (0) target = $region13
    $region12: #{tpu_custom_call.1} parent=1 // pred_region
      _
    $region13: #{tpu_custom_call.1} parent=1 // pred_fallthru
      _
    // Predicated region
    $region14: #{tpu_custom_call.1} parent=1 // pred_check
      _
    $region15: #{tpu_custom_call.1} parent=1 // pred_check_branch
      %37 = sbr.rel (0) target = $region17
    $region16: #{tpu_custom_call.1} parent=1 // pred_region
      %38 = dma.done [#allocation3], 4096
    $region17: #{tpu_custom_call.1} parent=1 // pred_fallthru
      _
    // Predicated region
    $region18: #{tpu_custom_call.1} parent=1 // pred_check
      _
    $region19: #{tpu_custom_call.1} parent=1 // pred_check_branch
      %40 = sbr.rel (0) target = $region21
    $region20: #{tpu_custom_call.1} parent=1 // pred_region
      %41 = dma.done [#allocation5], 1024
    $region21: #{tpu_custom_call.1} parent=1 // pred_fallthru
      _
    %v43 = vld [vmem:[#allocation2] sm:$0xf]
    %v44 = vld [vmem:[#allocation2 + $0x4] sm:$0xf]
    %v45 = vld [vmem:[#allocation2 + $0x8] sm:$0xf]
    %v46 = vld [vmem:[#allocation2 + $0xc] sm:$0xf]
    %v47 = vld [vmem:[#allocation2 + $0x10] sm:$0xf]
    %v48 = vld [vmem:[#allocation2 + $0x14] sm:$0xf]
    %v49 = vld [vmem:[#allocation2 + $0x18] sm:$0xf]
    %v50 = vld [vmem:[#allocation2 + $0x1c] sm:$0xf]
    %v51 = vld [vmem:[#allocation2 + $0x20] sm:$0xf]
    %v52 = vld [vmem:[#allocation2 + $0x24] sm:$0xf]
    %v53 = vld [vmem:[#allocation2 + $0x28] sm:$0xf]
    %v54 = vld [vmem:[#allocation2 + $0x2c] sm:$0xf]
    %v55 = vld [vmem:[#allocation2 + $0x30] sm:$0xf]
    %v56 = vld [vmem:[#allocation2 + $0x34] sm:$0xf]
    %v57 = vld [vmem:[#allocation2 + $0x38] sm:$0xf]
    %v58 = vld [vmem:[#allocation2 + $0x3c] sm:$0xf]
    %v59 = vld [vmem:[#allocation2 + $0x40] sm:$0xf]
    %v60 = vld [vmem:[#allocation2 + $0x44] sm:$0xf]
    %v61 = vld [vmem:[#allocation2 + $0x48] sm:$0xf]
    %v62 = vld [vmem:[#allocation2 + $0x4c] sm:$0xf]
    %v63 = vld [vmem:[#allocation2 + $0x50] sm:$0xf]
    %v64 = vld [vmem:[#allocation2 + $0x54] sm:$0xf]
    %v65 = vld [vmem:[#allocation2 + $0x58] sm:$0xf]
    %v66 = vld [vmem:[#allocation2 + $0x5c] sm:$0xf]
    %v67 = vld [vmem:[#allocation2 + $0x60] sm:$0xf]
    %v68 = vld [vmem:[#allocation2 + $0x64] sm:$0xf]
    %v69 = vld [vmem:[#allocation2 + $0x68] sm:$0xf]
    %v70 = vld [vmem:[#allocation2 + $0x6c] sm:$0xf]
    %v71 = vld [vmem:[#allocation2 + $0x70] sm:$0xf]
    %v72 = vld [vmem:[#allocation2 + $0x74] sm:$0xf]
    %v73 = vld [vmem:[#allocation2 + $0x78] sm:$0xf]
    %v74 = vld [vmem:[#allocation2 + $0x7c] sm:$0xf]
    %v75 = vld [vmem:[#allocation2 + $0x80] sm:$0xf]
    %v76 = vld [vmem:[#allocation2 + $0x84] sm:$0xf]
    %v77 = vld [vmem:[#allocation2 + $0x88] sm:$0xf]
    %v78 = vld [vmem:[#allocation2 + $0x8c] sm:$0xf]
    %v79 = vld [vmem:[#allocation2 + $0x90] sm:$0xf]
    %v80 = vld [vmem:[#allocation2 + $0x94] sm:$0xf]
    %v81 = vld [vmem:[#allocation2 + $0x98] sm:$0xf]
    %v82 = vld [vmem:[#allocation2 + $0x9c] sm:$0xf]
    %v83 = vld [vmem:[#allocation2 + $0xa0] sm:$0xf]
    %v84 = vld [vmem:[#allocation2 + $0xa4] sm:$0xf]
    %v85 = vld [vmem:[#allocation2 + $0xa8] sm:$0xf]
    %v86 = vld [vmem:[#allocation2 + $0xac] sm:$0xf]
    %v87 = vld [vmem:[#allocation2 + $0xb0] sm:$0xf]
    %v88 = vld [vmem:[#allocation2 + $0xb4] sm:$0xf]
    %v89 = vld [vmem:[#allocation2 + $0xb8] sm:$0xf]
    %v90 = vld [vmem:[#allocation2 + $0xbc] sm:$0xf]
    %v91 = vld [vmem:[#allocation2 + $0xc0] sm:$0xf]
    %v92 = vld [vmem:[#allocation2 + $0xc4] sm:$0xf]
    %v93 = vld [vmem:[#allocation2 + $0xc8] sm:$0xf]
    %v94 = vld [vmem:[#allocation2 + $0xcc] sm:$0xf]
    %v95 = vld [vmem:[#allocation2 + $0xd0] sm:$0xf]
    %v96 = vld [vmem:[#allocation2 + $0xd4] sm:$0xf]
    %v97 = vld [vmem:[#allocation2 + $0xd8] sm:$0xf]
    %v98 = vld [vmem:[#allocation2 + $0xdc] sm:$0xf]
    %v99 = vld [vmem:[#allocation2 + $0xe0] sm:$0xf]
    %v100 = vld [vmem:[#allocation2 + $0xe4] sm:$0xf]
    %v101 = vld [vmem:[#allocation2 + $0xe8] sm:$0xf]
    %v102 = vld [vmem:[#allocation2 + $0xec] sm:$0xf]
    %v103 = vld [vmem:[#allocation2 + $0xf0] sm:$0xf]
    %v104 = vld [vmem:[#allocation2 + $0xf4] sm:$0xf]
    %v105 = vld [vmem:[#allocation2 + $0xf8] sm:$0xf]
    %v106 = vld [vmem:[#allocation2 + $0xfc] sm:$0xf]
    %v107 = vld [vmem:[#allocation4] sm:$0xf]
    %v108 = vld [vmem:[#allocation4 + $0x4] sm:$0xf]
    %v109 = vld [vmem:[#allocation4 + $0x8] sm:$0xf]
    %v110 = vld [vmem:[#allocation4 + $0xc] sm:$0xf]
    %v111 = vld [vmem:[#allocation4 + $0x10] sm:$0xf]
    %v112 = vld [vmem:[#allocation4 + $0x14] sm:$0xf]
    %v113 = vld [vmem:[#allocation4 + $0x18] sm:$0xf]
    %v114 = vld [vmem:[#allocation4 + $0x1c] sm:$0xf]
    %v115 = vld [vmem:[#allocation4 + $0x20] sm:$0xf]
    %v116 = vld [vmem:[#allocation4 + $0x24] sm:$0xf]
    %v117 = vld [vmem:[#allocation4 + $0x28] sm:$0xf]
    %v118 = vld [vmem:[#allocation4 + $0x2c] sm:$0xf]
    %v119 = vld [vmem:[#allocation4 + $0x30] sm:$0xf]
    %v120 = vld [vmem:[#allocation4 + $0x34] sm:$0xf]
    %v121 = vld [vmem:[#allocation4 + $0x38] sm:$0xf]
    %v122 = vld [vmem:[#allocation4 + $0x3c] sm:$0xf]
    %v123 = vld [vmem:[%s2] sm:$0x1]
    %v125 = vlaneseq
    %v126 = vshrl.u32 %v125, 7
    %v127 = vsub.s32 0, %v126
    %v128 = vrot.slane %v123, %v127
    %v194 = vunpack.c.l.b16 %v43
    %v195 = vunpack.c.l.b16 %v44
    %v196 = vunpack.c.l.b16 %v45
    %v197 = vunpack.c.l.b16 %v46
    %v198 = vunpack.c.l.b16 %v47
    %v199 = vunpack.c.l.b16 %v48
    %v200 = vunpack.c.l.b16 %v49
    %v201 = vunpack.c.l.b16 %v50
    %v202 = vunpack.c.l.b16 %v51
    %v203 = vunpack.c.l.b16 %v52
    %v204 = vunpack.c.l.b16 %v53
    %v205 = vunpack.c.l.b16 %v54
    %v206 = vunpack.c.l.b16 %v55
    %v207 = vunpack.c.l.b16 %v56
    %v208 = vunpack.c.l.b16 %v57
    %v209 = vunpack.c.l.b16 %v58
    %v210 = vunpack.c.l.b16 %v59
    %v211 = vunpack.c.l.b16 %v60
    %v212 = vunpack.c.l.b16 %v61
    %v213 = vunpack.c.l.b16 %v62
    %v214 = vunpack.c.l.b16 %v63
    %v215 = vunpack.c.l.b16 %v64
    %v216 = vunpack.c.l.b16 %v65
    %v217 = vunpack.c.l.b16 %v66
    %v218 = vunpack.c.l.b16 %v67
    %v219 = vunpack.c.l.b16 %v68
    %v220 = vunpack.c.l.b16 %v69
    %v221 = vunpack.c.l.b16 %v70
    %v222 = vunpack.c.l.b16 %v71
    %v223 = vunpack.c.l.b16 %v72
    %v224 = vunpack.c.l.b16 %v73
    %v225 = vunpack.c.l.b16 %v74
    %v226 = vunpack.c.l.b16 %v75
    %v227 = vunpack.c.l.b16 %v76
    %v228 = vunpack.c.l.b16 %v77
    %v229 = vunpack.c.l.b16 %v78
    %v230 = vunpack.c.l.b16 %v79
    %v231 = vunpack.c.l.b16 %v80
    %v232 = vunpack.c.l.b16 %v81
    %v233 = vunpack.c.l.b16 %v82
    %v234 = vunpack.c.l.b16 %v83
    %v235 = vunpack.c.l.b16 %v84
    %v236 = vunpack.c.l.b16 %v85
    %v237 = vunpack.c.l.b16 %v86
    %v238 = vunpack.c.l.b16 %v87
    %v239 = vunpack.c.l.b16 %v88
    %v240 = vunpack.c.l.b16 %v89
    %v241 = vunpack.c.l.b16 %v90
    %v242 = vunpack.c.l.b16 %v91
    %v243 = vunpack.c.l.b16 %v92
    %v244 = vunpack.c.l.b16 %v93
    %v245 = vunpack.c.l.b16 %v94
    %v246 = vunpack.c.l.b16 %v95
    %v247 = vunpack.c.l.b16 %v96
    %v248 = vunpack.c.l.b16 %v97
    %v249 = vunpack.c.l.b16 %v98
    %v250 = vunpack.c.l.b16 %v99
    %v251 = vunpack.c.l.b16 %v100
    %v252 = vunpack.c.l.b16 %v101
    %v253 = vunpack.c.l.b16 %v102
    %v254 = vunpack.c.l.b16 %v103
    %v255 = vunpack.c.l.b16 %v104
    %v256 = vunpack.c.l.b16 %v105
    %v257 = vunpack.c.l.b16 %v106
    %v258 = vpack.c.b16 %v195, %v194
    %v259 = vpack.c.b16 %v197, %v196
    %v260 = vpack.c.b16 %v199, %v198
    %v261 = vpack.c.b16 %v201, %v200
    %v262 = vpack.c.b16 %v203, %v202
    %v263 = vpack.c.b16 %v205, %v204
    %v264 = vpack.c.b16 %v207, %v206
    %v265 = vpack.c.b16 %v209, %v208
    %v266 = vpack.c.b16 %v211, %v210
    %v267 = vpack.c.b16 %v213, %v212
    %v268 = vpack.c.b16 %v215, %v214
    %v269 = vpack.c.b16 %v217, %v216
    %v270 = vpack.c.b16 %v219, %v218
    %v271 = vpack.c.b16 %v221, %v220
    %v272 = vpack.c.b16 %v223, %v222
    %v273 = vpack.c.b16 %v225, %v224
    %v274 = vpack.c.b16 %v227, %v226
    %v275 = vpack.c.b16 %v229, %v228
    %v276 = vpack.c.b16 %v231, %v230
    %v277 = vpack.c.b16 %v233, %v232
    %v278 = vpack.c.b16 %v235, %v234
    %v279 = vpack.c.b16 %v237, %v236
    %v280 = vpack.c.b16 %v239, %v238
    %v281 = vpack.c.b16 %v241, %v240
    %v282 = vpack.c.b16 %v243, %v242
    %v283 = vpack.c.b16 %v245, %v244
    %v284 = vpack.c.b16 %v247, %v246
    %v285 = vpack.c.b16 %v249, %v248
    %v286 = vpack.c.b16 %v251, %v250
    %v287 = vpack.c.b16 %v253, %v252
    %v288 = vpack.c.b16 %v255, %v254
    %v289 = vpack.c.b16 %v257, %v256
    %v338 = vunpack.c.l.b16 %v107
    %v339 = vunpack.c.l.b16 %v108
    %v340 = vunpack.c.l.b16 %v109
    %v341 = vunpack.c.l.b16 %v110
    %v342 = vunpack.c.l.b16 %v111
    %v343 = vunpack.c.l.b16 %v112
    %v344 = vunpack.c.l.b16 %v113
    %v345 = vunpack.c.l.b16 %v114
    %v346 = vunpack.c.l.b16 %v115
    %v347 = vunpack.c.l.b16 %v116
    %v348 = vunpack.c.l.b16 %v117
    %v349 = vunpack.c.l.b16 %v118
    %v350 = vunpack.c.l.b16 %v119
    %v351 = vunpack.c.l.b16 %v120
    %v352 = vunpack.c.l.b16 %v121
    %v353 = vunpack.c.l.b16 %v122
    %v354 = vpack.c.b16 %v339, %v338
    %v355 = vpack.c.b16 %v341, %v340
    %v356 = vpack.c.b16 %v343, %v342
    %v357 = vpack.c.b16 %v345, %v344
    %v358 = vpack.c.b16 %v347, %v346
    %v359 = vpack.c.b16 %v349, %v348
    %v360 = vpack.c.b16 %v351, %v350
    %v361 = vpack.c.b16 %v353, %v352
    %370 = vmatprep.subr.bf16.mxu0 0
    %371 = vmatpush1.bf16.msra.mxu0 %v361
    %372 = vmatprep.subr.bf16.mxu0 0
    %373 = vmatpush1.bf16.msra.mxu0 %v360
    %374 = vmatprep.subr.bf16.mxu0 0
    %375 = vmatpush1.bf16.msra.mxu0 %v359
    %376 = vmatprep.subr.bf16.mxu0 0
    %377 = vmatpush1.bf16.msra.mxu0 %v358
    %378 = vmatprep.subr.bf16.mxu0 0
    %379 = vmatpush1.bf16.msra.mxu0 %v357
    %380 = vmatprep.subr.bf16.mxu0 0
    %381 = vmatpush1.bf16.msra.mxu0 %v356
    %382 = vmatprep.subr.bf16.mxu0 0
    %383 = vmatpush1.bf16.msra.mxu0 %v355
    %384 = vmatprep.subr.bf16.mxu0 0
    %385 = vmatpush1.bf16.msra.mxu0 %v354
    %386 = vmatprep.subr.bf16.mxu0 0
    %387 = vmatpush2.bf16.msra.mxu0 0
    %388 = vmatprep.subr.bf16.mxu0 0
    %389 = vmatpush2.bf16.msra.mxu0 0
    %390 = vmatprep.subr.bf16.mxu0 0
    %391 = vmatpush2.bf16.msra.mxu0 0
    %392 = vmatprep.subr.bf16.mxu0 0
    %393 = vmatpush2.bf16.msra.mxu0 0
    %394 = vmatprep.subr.bf16.mxu0 0
    %395 = vmatpush2.bf16.msra.mxu0 0
    %396 = vmatprep.subr.bf16.mxu0 0
    %397 = vmatpush2.bf16.msra.mxu0 0
    %398 = vmatprep.subr.bf16.mxu0 0
    %399 = vmatpush2.bf16.msra.mxu0 0
    %400 = vmatprep.subr.bf16.mxu0 0
    %401 = vmatpush2.bf16.msra.mxu0 0
    %402 = vmatprep.mubr.bf16.mxu0 0
    %403 = vmatmul.mubr.bf16.gmra.mxu0 %v258
    %v404 = vpop.f32.mrf.mxu0
    %v405 = vadd.f32 %v128, %v404
    %v406 = vpop.f32.mrf.mxu0
    %v407 = vpop.f32.mrf.mxu0
    %v408 = vadd.f32 %v128, %v407
    %v409 = vpop.f32.mrf.mxu0
    %410 = vmatprep.mubr.bf16.mxu0 0
    %411 = vmatmul.mubr.bf16.gmra.mxu0 %v259
    %v412 = vpop.f32.mrf.mxu0
    %v413 = vadd.f32 %v128, %v412
    %v414 = vpop.f32.mrf.mxu0
    %v415 = vpop.f32.mrf.mxu0
    %v416 = vadd.f32 %v128, %v415
    %v417 = vpop.f32.mrf.mxu0
    %418 = vmatprep.mubr.bf16.mxu0 0
    %419 = vmatmul.mubr.bf16.gmra.mxu0 %v260
    %v420 = vpop.f32.mrf.mxu0
    %v421 = vadd.f32 %v128, %v420
    %v422 = vpop.f32.mrf.mxu0
    %v423 = vpop.f32.mrf.mxu0
    %v424 = vadd.f32 %v128, %v423
    %v425 = vpop.f32.mrf.mxu0
    %426 = vmatprep.mubr.bf16.mxu0 0
    %427 = vmatmul.mubr.bf16.gmra.mxu0 %v261
    %v428 = vpop.f32.mrf.mxu0
    %v429 = vadd.f32 %v128, %v428
    %v430 = vpop.f32.mrf.mxu0
    %v431 = vpop.f32.mrf.mxu0
    %v432 = vadd.f32 %v128, %v431
    %v433 = vpop.f32.mrf.mxu0
    %434 = vmatprep.mubr.bf16.mxu0 0
    %435 = vmatmul.mubr.bf16.gmra.mxu0 %v262
    %v436 = vpop.f32.mrf.mxu0
    %v437 = vadd.f32 %v128, %v436
    %v438 = vpop.f32.mrf.mxu0
    %v439 = vpop.f32.mrf.mxu0
    %v440 = vadd.f32 %v128, %v439
    %v441 = vpop.f32.mrf.mxu0
    %442 = vmatprep.mubr.bf16.mxu0 0
    %443 = vmatmul.mubr.bf16.gmra.mxu0 %v263
    %v444 = vpop.f32.mrf.mxu0
    %v445 = vadd.f32 %v128, %v444
    %v446 = vpop.f32.mrf.mxu0
    %v447 = vpop.f32.mrf.mxu0
    %v448 = vadd.f32 %v128, %v447
    %v449 = vpop.f32.mrf.mxu0
    %450 = vmatprep.mubr.bf16.mxu0 0
    %451 = vmatmul.mubr.bf16.gmra.mxu0 %v264
    %v452 = vpop.f32.mrf.mxu0
    %v453 = vadd.f32 %v128, %v452
    %v454 = vpop.f32.mrf.mxu0
    %v455 = vpop.f32.mrf.mxu0
    %v456 = vadd.f32 %v128, %v455
    %v457 = vpop.f32.mrf.mxu0
    %458 = vmatprep.mubr.bf16.mxu0 0
    %459 = vmatmul.mubr.bf16.gmra.mxu0 %v265
    %v460 = vpop.f32.mrf.mxu0
    %v461 = vadd.f32 %v128, %v460
    %v462 = vpop.f32.mrf.mxu0
    %v463 = vpop.f32.mrf.mxu0
    %v464 = vadd.f32 %v128, %v463
    %v465 = vpop.f32.mrf.mxu0
    %466 = vmatprep.mubr.bf16.mxu0 0
    %467 = vmatmul.mubr.bf16.gmra.mxu0 %v266
    %v468 = vpop.f32.mrf.mxu0
    %v469 = vadd.f32 %v128, %v468
    %v470 = vpop.f32.mrf.mxu0
    %v471 = vpop.f32.mrf.mxu0
    %v472 = vadd.f32 %v128, %v471
    %v473 = vpop.f32.mrf.mxu0
    %474 = vmatprep.mubr.bf16.mxu0 0
    %475 = vmatmul.mubr.bf16.gmra.mxu0 %v267
    %v476 = vpop.f32.mrf.mxu0
    %v477 = vadd.f32 %v128, %v476
    %v478 = vpop.f32.mrf.mxu0
    %v479 = vpop.f32.mrf.mxu0
    %v480 = vadd.f32 %v128, %v479
    %v481 = vpop.f32.mrf.mxu0
    %482 = vmatprep.mubr.bf16.mxu0 0
    %483 = vmatmul.mubr.bf16.gmra.mxu0 %v268
    %v484 = vpop.f32.mrf.mxu0
    %v485 = vadd.f32 %v128, %v484
    %v486 = vpop.f32.mrf.mxu0
    %v487 = vpop.f32.mrf.mxu0
    %v488 = vadd.f32 %v128, %v487
    %v489 = vpop.f32.mrf.mxu0
    %490 = vmatprep.mubr.bf16.mxu0 0
    %491 = vmatmul.mubr.bf16.gmra.mxu0 %v269
    %v492 = vpop.f32.mrf.mxu0
    %v493 = vadd.f32 %v128, %v492
    %v494 = vpop.f32.mrf.mxu0
    %v495 = vpop.f32.mrf.mxu0
    %v496 = vadd.f32 %v128, %v495
    %v497 = vpop.f32.mrf.mxu0
    %498 = vmatprep.mubr.bf16.mxu0 0
    %499 = vmatmul.mubr.bf16.gmra.mxu0 %v270
    %v500 = vpop.f32.mrf.mxu0
    %v501 = vadd.f32 %v128, %v500
    %v502 = vpop.f32.mrf.mxu0
    %v503 = vpop.f32.mrf.mxu0
    %v504 = vadd.f32 %v128, %v503
    %v505 = vpop.f32.mrf.mxu0
    %506 = vmatprep.mubr.bf16.mxu0 0
    %507 = vmatmul.mubr.bf16.gmra.mxu0 %v271
    %v508 = vpop.f32.mrf.mxu0
    %v509 = vadd.f32 %v128, %v508
    %v510 = vpop.f32.mrf.mxu0
    %v511 = vpop.f32.mrf.mxu0
    %v512 = vadd.f32 %v128, %v511
    %v513 = vpop.f32.mrf.mxu0
    %514 = vmatprep.mubr.bf16.mxu0 0
    %515 = vmatmul.mubr.bf16.gmra.mxu0 %v272
    %v516 = vpop.f32.mrf.mxu0
    %v517 = vadd.f32 %v128, %v516
    %v518 = vpop.f32.mrf.mxu0
    %v519 = vpop.f32.mrf.mxu0
    %v520 = vadd.f32 %v128, %v519
    %v521 = vpop.f32.mrf.mxu0
    %522 = vmatprep.mubr.bf16.mxu0 0
    %523 = vmatmul.mubr.bf16.gmra.mxu0 %v273
    %v524 = vpop.f32.mrf.mxu0
    %v525 = vadd.f32 %v128, %v524
    %v526 = vpop.f32.mrf.mxu0
    %v527 = vpop.f32.mrf.mxu0
    %v528 = vadd.f32 %v128, %v527
    %v529 = vpop.f32.mrf.mxu0
    %530 = vmatprep.mubr.bf16.mxu0 0
    %531 = vmatmul.mubr.bf16.gmra.mxu0 %v274
    %v532 = vpop.f32.mrf.mxu0
    %v533 = vadd.f32 %v128, %v532
    %v534 = vpop.f32.mrf.mxu0
    %v535 = vpop.f32.mrf.mxu0
    %v536 = vadd.f32 %v128, %v535
    %v537 = vpop.f32.mrf.mxu0
    %538 = vmatprep.mubr.bf16.mxu0 0
    %539 = vmatmul.mubr.bf16.gmra.mxu0 %v275
    %v540 = vpop.f32.mrf.mxu0
    %v541 = vadd.f32 %v128, %v540
    %v542 = vpop.f32.mrf.mxu0
    %v543 = vpop.f32.mrf.mxu0
    %v544 = vadd.f32 %v128, %v543
    %v545 = vpop.f32.mrf.mxu0
    %546 = vmatprep.mubr.bf16.mxu0 0
    %547 = vmatmul.mubr.bf16.gmra.mxu0 %v276
    %v548 = vpop.f32.mrf.mxu0
    %v549 = vadd.f32 %v128, %v548
    %v550 = vpop.f32.mrf.mxu0
    %v551 = vpop.f32.mrf.mxu0
    %v552 = vadd.f32 %v128, %v551
    %v553 = vpop.f32.mrf.mxu0
    %554 = vmatprep.mubr.bf16.mxu0 0
    %555 = vmatmul.mubr.bf16.gmra.mxu0 %v277
    %v556 = vpop.f32.mrf.mxu0
    %v557 = vadd.f32 %v128, %v556
    %v558 = vpop.f32.mrf.mxu0
    %v559 = vpop.f32.mrf.mxu0
    %v560 = vadd.f32 %v128, %v559
    %v561 = vpop.f32.mrf.mxu0
    %562 = vmatprep.mubr.bf16.mxu0 0
    %563 = vmatmul.mubr.bf16.gmra.mxu0 %v278
    %v564 = vpop.f32.mrf.mxu0
    %v565 = vadd.f32 %v128, %v564
    %v566 = vpop.f32.mrf.mxu0
    %v567 = vpop.f32.mrf.mxu0
    %v568 = vadd.f32 %v128, %v567
    %v569 = vpop.f32.mrf.mxu0
    %570 = vmatprep.mubr.bf16.mxu0 0
    %571 = vmatmul.mubr.bf16.gmra.mxu0 %v279
    %v572 = vpop.f32.mrf.mxu0
    %v573 = vadd.f32 %v128, %v572
    %v574 = vpop.f32.mrf.mxu0
    %v575 = vpop.f32.mrf.mxu0
    %v576 = vadd.f32 %v128, %v575
    %v577 = vpop.f32.mrf.mxu0
    %578 = vmatprep.mubr.bf16.mxu0 0
    %579 = vmatmul.mubr.bf16.gmra.mxu0 %v280
    %v580 = vpop.f32.mrf.mxu0
    %v581 = vadd.f32 %v128, %v580
    %v582 = vpop.f32.mrf.mxu0
    %v583 = vpop.f32.mrf.mxu0
    %v584 = vadd.f32 %v128, %v583
    %v585 = vpop.f32.mrf.mxu0
    %586 = vmatprep.mubr.bf16.mxu0 0
    %587 = vmatmul.mubr.bf16.gmra.mxu0 %v281
    %v588 = vpop.f32.mrf.mxu0
    %v589 = vadd.f32 %v128, %v588
    %v590 = vpop.f32.mrf.mxu0
    %v591 = vpop.f32.mrf.mxu0
    %v592 = vadd.f32 %v128, %v591
    %v593 = vpop.f32.mrf.mxu0
    %594 = vmatprep.mubr.bf16.mxu0 0
    %595 = vmatmul.mubr.bf16.gmra.mxu0 %v282
    %v596 = vpop.f32.mrf.mxu0
    %v597 = vadd.f32 %v128, %v596
    %v598 = vpop.f32.mrf.mxu0
    %v599 = vpop.f32.mrf.mxu0
    %v600 = vadd.f32 %v128, %v599
    %v601 = vpop.f32.mrf.mxu0
    %602 = vmatprep.mubr.bf16.mxu0 0
    %603 = vmatmul.mubr.bf16.gmra.mxu0 %v283
    %v604 = vpop.f32.mrf.mxu0
    %v605 = vadd.f32 %v128, %v604
    %v606 = vpop.f32.mrf.mxu0
    %v607 = vpop.f32.mrf.mxu0
    %v608 = vadd.f32 %v128, %v607
    %v609 = vpop.f32.mrf.mxu0
    %610 = vmatprep.mubr.bf16.mxu0 0
    %611 = vmatmul.mubr.bf16.gmra.mxu0 %v284
    %v612 = vpop.f32.mrf.mxu0
    %v613 = vadd.f32 %v128, %v612
    %v614 = vpop.f32.mrf.mxu0
    %v615 = vpop.f32.mrf.mxu0
    %v616 = vadd.f32 %v128, %v615
    %v617 = vpop.f32.mrf.mxu0
    %618 = vmatprep.mubr.bf16.mxu0 0
    %619 = vmatmul.mubr.bf16.gmra.mxu0 %v285
    %v620 = vpop.f32.mrf.mxu0
    %v621 = vadd.f32 %v128, %v620
    %v622 = vpop.f32.mrf.mxu0
    %v623 = vpop.f32.mrf.mxu0
    %v624 = vadd.f32 %v128, %v623
    %v625 = vpop.f32.mrf.mxu0
    %626 = vmatprep.mubr.bf16.mxu0 0
    %627 = vmatmul.mubr.bf16.gmra.mxu0 %v286
    %v628 = vpop.f32.mrf.mxu0
    %v629 = vadd.f32 %v128, %v628
    %v630 = vpop.f32.mrf.mxu0
    %v631 = vpop.f32.mrf.mxu0
    %v632 = vadd.f32 %v128, %v631
    %v633 = vpop.f32.mrf.mxu0
    %634 = vmatprep.mubr.bf16.mxu0 0
    %635 = vmatmul.mubr.bf16.gmra.mxu0 %v287
    %v636 = vpop.f32.mrf.mxu0
    %v637 = vadd.f32 %v128, %v636
    %v638 = vpop.f32.mrf.mxu0
    %v639 = vpop.f32.mrf.mxu0
    %v640 = vadd.f32 %v128, %v639
    %v641 = vpop.f32.mrf.mxu0
    %642 = vmatprep.mubr.bf16.mxu0 0
    %643 = vmatmul.mubr.bf16.gmra.mxu0 %v288
    %v644 = vpop.f32.mrf.mxu0
    %v645 = vadd.f32 %v128, %v644
    %v646 = vpop.f32.mrf.mxu0
    %v647 = vpop.f32.mrf.mxu0
    %v648 = vadd.f32 %v128, %v647
    %v649 = vpop.f32.mrf.mxu0
    %650 = vmatprep.mubr.bf16.mxu0 0
    %651 = vmatmul.mubr.bf16.gmra.mxu0 %v289
    %v652 = vpop.f32.mrf.mxu0
    %v653 = vadd.f32 %v128, %v652
    %v654 = vpop.f32.mrf.mxu0
    %v655 = vpop.f32.mrf.mxu0
    %v656 = vadd.f32 %v128, %v655
    %v657 = vpop.f32.mrf.mxu0
    %658 = vdwg.mxu0
    %v659 = vxor.u32 %v405, 2147483648
    %v660 = vxor.u32 %v408, 2147483648
    %v661 = vxor.u32 %v413, 2147483648
    %v662 = vxor.u32 %v416, 2147483648
    %v663 = vxor.u32 %v421, 2147483648
    %v664 = vxor.u32 %v424, 2147483648
    %v665 = vxor.u32 %v429, 2147483648
    %v666 = vxor.u32 %v432, 2147483648
    %v667 = vxor.u32 %v437, 2147483648
    %v668 = vxor.u32 %v440, 2147483648
    %v669 = vxor.u32 %v445, 2147483648
    %v670 = vxor.u32 %v448, 2147483648
    %v671 = vxor.u32 %v453, 2147483648
    %v672 = vxor.u32 %v456, 2147483648
    %v673 = vxor.u32 %v461, 2147483648
    %v674 = vxor.u32 %v464, 2147483648
    %v675 = vxor.u32 %v469, 2147483648
    %v676 = vxor.u32 %v472, 2147483648
    %v677 = vxor.u32 %v477, 2147483648
    %v678 = vxor.u32 %v480, 2147483648
    %v679 = vxor.u32 %v485, 2147483648
    %v680 = vxor.u32 %v488, 2147483648
    %v681 = vxor.u32 %v493, 2147483648
    %v682 = vxor.u32 %v496, 2147483648
    %v683 = vxor.u32 %v501, 2147483648
    %v684 = vxor.u32 %v504, 2147483648
    %v685 = vxor.u32 %v509, 2147483648
    %v686 = vxor.u32 %v512, 2147483648
    %v687 = vxor.u32 %v517, 2147483648
    %v688 = vxor.u32 %v520, 2147483648
    %v689 = vxor.u32 %v525, 2147483648
    %v690 = vxor.u32 %v528, 2147483648
    %v691 = vxor.u32 %v533, 2147483648
    %v692 = vxor.u32 %v536, 2147483648
    %v693 = vxor.u32 %v541, 2147483648
    %v694 = vxor.u32 %v544, 2147483648
    %v695 = vxor.u32 %v549, 2147483648
    %v696 = vxor.u32 %v552, 2147483648
    %v697 = vxor.u32 %v557, 2147483648
    %v698 = vxor.u32 %v560, 2147483648
    %v699 = vxor.u32 %v565, 2147483648
    %v700 = vxor.u32 %v568, 2147483648
    %v701 = vxor.u32 %v573, 2147483648
    %v702 = vxor.u32 %v576, 2147483648
    %v703 = vxor.u32 %v581, 2147483648
    %v704 = vxor.u32 %v584, 2147483648
    %v705 = vxor.u32 %v589, 2147483648
    %v706 = vxor.u32 %v592, 2147483648
    %v707 = vxor.u32 %v597, 2147483648
    %v708 = vxor.u32 %v600, 2147483648
    %v709 = vxor.u32 %v605, 2147483648
    %v710 = vxor.u32 %v608, 2147483648
    %v711 = vxor.u32 %v613, 2147483648
    %v712 = vxor.u32 %v616, 2147483648
    %v713 = vxor.u32 %v621, 2147483648
    %v714 = vxor.u32 %v624, 2147483648
    %v715 = vxor.u32 %v629, 2147483648
    %v716 = vxor.u32 %v632, 2147483648
    %v717 = vxor.u32 %v637, 2147483648
    %v718 = vxor.u32 %v640, 2147483648
    %v719 = vxor.u32 %v645, 2147483648
    %v720 = vxor.u32 %v648, 2147483648
    %v721 = vxor.u32 %v653, 2147483648
    %v722 = vxor.u32 %v656, 2147483648
    %v723 = vmul.f32 %v659, 1.442695
    %v724 = vpow.pop %v723
    %v725 = vmul.f32 %v660, 1.442695
    %v726 = vpow.pop %v725
    %v727 = vmul.f32 %v661, 1.442695
    %v728 = vpow.pop %v727
    %v729 = vmul.f32 %v662, 1.442695
    %v730 = vpow.pop %v729
    %v731 = vmul.f32 %v663, 1.442695
    %v732 = vpow.pop %v731
    %v733 = vmul.f32 %v664, 1.442695
    %v734 = vpow.pop %v733
    %v735 = vmul.f32 %v665, 1.442695
    %v736 = vpow.pop %v735
    %v737 = vmul.f32 %v666, 1.442695
    %v738 = vpow.pop %v737
    %v739 = vmul.f32 %v667, 1.442695
    %v740 = vpow.pop %v739
    %v741 = vmul.f32 %v668, 1.442695
    %v742 = vpow.pop %v741
    %v743 = vmul.f32 %v669, 1.442695
    %v744 = vpow.pop %v743
    %v745 = vmul.f32 %v670, 1.442695
    %v746 = vpow.pop %v745
    %v747 = vmul.f32 %v671, 1.442695
    %v748 = vpow.pop %v747
    %v749 = vmul.f32 %v672, 1.442695
    %v750 = vpow.pop %v749
    %v751 = vmul.f32 %v673, 1.442695
    %v752 = vpow.pop %v751
    %v753 = vmul.f32 %v674, 1.442695
    %v754 = vpow.pop %v753
    %v755 = vmul.f32 %v675, 1.442695
    %v756 = vpow.pop %v755
    %v757 = vmul.f32 %v676, 1.442695
    %v758 = vpow.pop %v757
    %v759 = vmul.f32 %v677, 1.442695
    %v760 = vpow.pop %v759
    %v761 = vmul.f32 %v678, 1.442695
    %v762 = vpow.pop %v761
    %v763 = vmul.f32 %v679, 1.442695
    %v764 = vpow.pop %v763
    %v765 = vmul.f32 %v680, 1.442695
    %v766 = vpow.pop %v765
    %v767 = vmul.f32 %v681, 1.442695
    %v768 = vpow.pop %v767
    %v769 = vmul.f32 %v682, 1.442695
    %v770 = vpow.pop %v769
    %v771 = vmul.f32 %v683, 1.442695
    %v772 = vpow.pop %v771
    %v773 = vmul.f32 %v684, 1.442695
    %v774 = vpow.pop %v773
    %v775 = vmul.f32 %v685, 1.442695
    %v776 = vpow.pop %v775
    %v777 = vmul.f32 %v686, 1.442695
    %v778 = vpow.pop %v777
    %v779 = vmul.f32 %v687, 1.442695
    %v780 = vpow.pop %v779
    %v781 = vmul.f32 %v688, 1.442695
    %v782 = vpow.pop %v781
    %v783 = vmul.f32 %v689, 1.442695
    %v784 = vpow.pop %v783
    %v785 = vmul.f32 %v690, 1.442695
    %v786 = vpow.pop %v785
    %v787 = vmul.f32 %v691, 1.442695
    %v788 = vpow.pop %v787
    %v789 = vmul.f32 %v692, 1.442695
    %v790 = vpow.pop %v789
    %v791 = vmul.f32 %v693, 1.442695
    %v792 = vpow.pop %v791
    %v793 = vmul.f32 %v694, 1.442695
    %v794 = vpow.pop %v793
    %v795 = vmul.f32 %v695, 1.442695
    %v796 = vpow.pop %v795
    %v797 = vmul.f32 %v696, 1.442695
    %v798 = vpow.pop %v797
    %v799 = vmul.f32 %v697, 1.442695
    %v800 = vpow.pop %v799
    %v801 = vmul.f32 %v698, 1.442695
    %v802 = vpow.pop %v801
    %v803 = vmul.f32 %v699, 1.442695
    %v804 = vpow.pop %v803
    %v805 = vmul.f32 %v700, 1.442695
    %v806 = vpow.pop %v805
    %v807 = vmul.f32 %v701, 1.442695
    %v808 = vpow.pop %v807
    %v809 = vmul.f32 %v702, 1.442695
    %v810 = vpow.pop %v809
    %v811 = vmul.f32 %v703, 1.442695
    %v812 = vpow.pop %v811
    %v813 = vmul.f32 %v704, 1.442695
    %v814 = vpow.pop %v813
    %v815 = vmul.f32 %v705, 1.442695
    %v816 = vpow.pop %v815
    %v817 = vmul.f32 %v706, 1.442695
    %v818 = vpow.pop %v817
    %v819 = vmul.f32 %v707, 1.442695
    %v820 = vpow.pop %v819
    %v821 = vmul.f32 %v708, 1.442695
    %v822 = vpow.pop %v821
    %v823 = vmul.f32 %v709, 1.442695
    %v824 = vpow.pop %v823
    %v825 = vmul.f32 %v710, 1.442695
    %v826 = vpow.pop %v825
    %v827 = vmul.f32 %v711, 1.442695
    %v828 = vpow.pop %v827
    %v829 = vmul.f32 %v712, 1.442695
    %v830 = vpow.pop %v829
    %v831 = vmul.f32 %v713, 1.442695
    %v832 = vpow.pop %v831
    %v833 = vmul.f32 %v714, 1.442695
    %v834 = vpow.pop %v833
    %v835 = vmul.f32 %v715, 1.442695
    %v836 = vpow.pop %v835
    %v837 = vmul.f32 %v716, 1.442695
    %v838 = vpow.pop %v837
    %v839 = vmul.f32 %v717, 1.442695
    %v840 = vpow.pop %v839
    %v841 = vmul.f32 %v718, 1.442695
    %v842 = vpow.pop %v841
    %v843 = vmul.f32 %v719, 1.442695
    %v844 = vpow.pop %v843
    %v845 = vmul.f32 %v720, 1.442695
    %v846 = vpow.pop %v845
    %v847 = vmul.f32 %v721, 1.442695
    %v848 = vpow.pop %v847
    %v849 = vmul.f32 %v722, 1.442695
    %v850 = vpow.pop %v849
    %v851 = vadd.f32 %v724, 1.0
    %v852 = vadd.f32 %v726, 1.0
    %v853 = vadd.f32 %v728, 1.0
    %v854 = vadd.f32 %v730, 1.0
    %v855 = vadd.f32 %v732, 1.0
    %v856 = vadd.f32 %v734, 1.0
    %v857 = vadd.f32 %v736, 1.0
    %v858 = vadd.f32 %v738, 1.0
    %v859 = vadd.f32 %v740, 1.0
    %v860 = vadd.f32 %v742, 1.0
    %v861 = vadd.f32 %v744, 1.0
    %v862 = vadd.f32 %v746, 1.0
    %v863 = vadd.f32 %v748, 1.0
    %v864 = vadd.f32 %v750, 1.0
    %v865 = vadd.f32 %v752, 1.0
    %v866 = vadd.f32 %v754, 1.0
    %v867 = vadd.f32 %v756, 1.0
    %v868 = vadd.f32 %v758, 1.0
    %v869 = vadd.f32 %v760, 1.0
    %v870 = vadd.f32 %v762, 1.0
    %v871 = vadd.f32 %v764, 1.0
    %v872 = vadd.f32 %v766, 1.0
    %v873 = vadd.f32 %v768, 1.0
    %v874 = vadd.f32 %v770, 1.0
    %v875 = vadd.f32 %v772, 1.0
    %v876 = vadd.f32 %v774, 1.0
    %v877 = vadd.f32 %v776, 1.0
    %v878 = vadd.f32 %v778, 1.0
    %v879 = vadd.f32 %v780, 1.0
    %v880 = vadd.f32 %v782, 1.0
    %v881 = vadd.f32 %v784, 1.0
    %v882 = vadd.f32 %v786, 1.0
    %v883 = vadd.f32 %v788, 1.0
    %v884 = vadd.f32 %v790, 1.0
    %v885 = vadd.f32 %v792, 1.0
    %v886 = vadd.f32 %v794, 1.0
    %v887 = vadd.f32 %v796, 1.0
    %v888 = vadd.f32 %v798, 1.0
    %v889 = vadd.f32 %v800, 1.0
    %v890 = vadd.f32 %v802, 1.0
    %v891 = vadd.f32 %v804, 1.0
    %v892 = vadd.f32 %v806, 1.0
    %v893 = vadd.f32 %v808, 1.0
    %v894 = vadd.f32 %v810, 1.0
    %v895 = vadd.f32 %v812, 1.0
    %v896 = vadd.f32 %v814, 1.0
    %v897 = vadd.f32 %v816, 1.0
    %v898 = vadd.f32 %v818, 1.0
    %v899 = vadd.f32 %v820, 1.0
    %v900 = vadd.f32 %v822, 1.0
    %v901 = vadd.f32 %v824, 1.0
    %v902 = vadd.f32 %v826, 1.0
    %v903 = vadd.f32 %v828, 1.0
    %v904 = vadd.f32 %v830, 1.0
    %v905 = vadd.f32 %v832, 1.0
    %v906 = vadd.f32 %v834, 1.0
    %v907 = vadd.f32 %v836, 1.0
    %v908 = vadd.f32 %v838, 1.0
    %v909 = vadd.f32 %v840, 1.0
    %v910 = vadd.f32 %v842, 1.0
    %v911 = vadd.f32 %v844, 1.0
    %v912 = vadd.f32 %v846, 1.0
    %v913 = vadd.f32 %v848, 1.0
    %v914 = vadd.f32 %v850, 1.0
    %v915 = vrcp.pop %v851
    %v916 = vmul.f32 1.0, %v915
    %v917 = vrcp.pop %v852
    %v918 = vmul.f32 1.0, %v917
    %v919 = vrcp.pop %v853
    %v920 = vmul.f32 1.0, %v919
    %v921 = vrcp.pop %v854
    %v922 = vmul.f32 1.0, %v921
    %v923 = vrcp.pop %v855
    %v924 = vmul.f32 1.0, %v923
    %v925 = vrcp.pop %v856
    %v926 = vmul.f32 1.0, %v925
    %v927 = vrcp.pop %v857
    %v928 = vmul.f32 1.0, %v927
    %v929 = vrcp.pop %v858
    %v930 = vmul.f32 1.0, %v929
    %v931 = vrcp.pop %v859
    %v932 = vmul.f32 1.0, %v931
    %v933 = vrcp.pop %v860
    %v934 = vmul.f32 1.0, %v933
    %v935 = vrcp.pop %v861
    %v936 = vmul.f32 1.0, %v935
    %v937 = vrcp.pop %v862
    %v938 = vmul.f32 1.0, %v937
    %v939 = vrcp.pop %v863
    %v940 = vmul.f32 1.0, %v939
    %v941 = vrcp.pop %v864
    %v942 = vmul.f32 1.0, %v941
    %v943 = vrcp.pop %v865
    %v944 = vmul.f32 1.0, %v943
    %v945 = vrcp.pop %v866
    %v946 = vmul.f32 1.0, %v945
    %v947 = vrcp.pop %v867
    %v948 = vmul.f32 1.0, %v947
    %v949 = vrcp.pop %v868
    %v950 = vmul.f32 1.0, %v949
    %v951 = vrcp.pop %v869
    %v952 = vmul.f32 1.0, %v951
    %v953 = vrcp.pop %v870
    %v954 = vmul.f32 1.0, %v953
    %v955 = vrcp.pop %v871
    %v956 = vmul.f32 1.0, %v955
    %v957 = vrcp.pop %v872
    %v958 = vmul.f32 1.0, %v957
    %v959 = vrcp.pop %v873
    %v960 = vmul.f32 1.0, %v959
    %v961 = vrcp.pop %v874
    %v962 = vmul.f32 1.0, %v961
    %v963 = vrcp.pop %v875
    %v964 = vmul.f32 1.0, %v963
    %v965 = vrcp.pop %v876
    %v966 = vmul.f32 1.0, %v965
    %v967 = vrcp.pop %v877
    %v968 = vmul.f32 1.0, %v967
    %v969 = vrcp.pop %v878
    %v970 = vmul.f32 1.0, %v969
    %v971 = vrcp.pop %v879
    %v972 = vmul.f32 1.0, %v971
    %v973 = vrcp.pop %v880
    %v974 = vmul.f32 1.0, %v973
    %v975 = vrcp.pop %v881
    %v976 = vmul.f32 1.0, %v975
    %v977 = vrcp.pop %v882
    %v978 = vmul.f32 1.0, %v977
    %v979 = vrcp.pop %v883
    %v980 = vmul.f32 1.0, %v979
    %v981 = vrcp.pop %v884
    %v982 = vmul.f32 1.0, %v981
    %v983 = vrcp.pop %v885
    %v984 = vmul.f32 1.0, %v983
    %v985 = vrcp.pop %v886
    %v986 = vmul.f32 1.0, %v985
    %v987 = vrcp.pop %v887
    %v988 = vmul.f32 1.0, %v987
    %v989 = vrcp.pop %v888
    %v990 = vmul.f32 1.0, %v989
    %v991 = vrcp.pop %v889
    %v992 = vmul.f32 1.0, %v991
    %v993 = vrcp.pop %v890
    %v994 = vmul.f32 1.0, %v993
    %v995 = vrcp.pop %v891
    %v996 = vmul.f32 1.0, %v995
    %v997 = vrcp.pop %v892
    %v998 = vmul.f32 1.0, %v997
    %v999 = vrcp.pop %v893
    %v1000 = vmul.f32 1.0, %v999
    %v1001 = vrcp.pop %v894
    %v1002 = vmul.f32 1.0, %v1001
    %v1003 = vrcp.pop %v895
    %v1004 = vmul.f32 1.0, %v1003
    %v1005 = vrcp.pop %v896
    %v1006 = vmul.f32 1.0, %v1005
    %v1007 = vrcp.pop %v897
    %v1008 = vmul.f32 1.0, %v1007
    %v1009 = vrcp.pop %v898
    %v1010 = vmul.f32 1.0, %v1009
    %v1011 = vrcp.pop %v899
    %v1012 = vmul.f32 1.0, %v1011
    %v1013 = vrcp.pop %v900
    %v1014 = vmul.f32 1.0, %v1013
    %v1015 = vrcp.pop %v901
    %v1016 = vmul.f32 1.0, %v1015
    %v1017 = vrcp.pop %v902
    %v1018 = vmul.f32 1.0, %v1017
    %v1019 = vrcp.pop %v903
    %v1020 = vmul.f32 1.0, %v1019
    %v1021 = vrcp.pop %v904
    %v1022 = vmul.f32 1.0, %v1021
    %v1023 = vrcp.pop %v905
    %v1024 = vmul.f32 1.0, %v1023
    %v1025 = vrcp.pop %v906
    %v1026 = vmul.f32 1.0, %v1025
    %v1027 = vrcp.pop %v907
    %v1028 = vmul.f32 1.0, %v1027
    %v1029 = vrcp.pop %v908
    %v1030 = vmul.f32 1.0, %v1029
    %v1031 = vrcp.pop %v909
    %v1032 = vmul.f32 1.0, %v1031
    %v1033 = vrcp.pop %v910
    %v1034 = vmul.f32 1.0, %v1033
    %v1035 = vrcp.pop %v911
    %v1036 = vmul.f32 1.0, %v1035
    %v1037 = vrcp.pop %v912
    %v1038 = vmul.f32 1.0, %v1037
    %v1039 = vrcp.pop %v913
    %v1040 = vmul.f32 1.0, %v1039
    %v1041 = vrcp.pop %v914
    %v1042 = vmul.f32 1.0, %v1041
    %vm1043 = vcmp.ge.f32.partialorder %v405, 0.0
    %vm1044 = vcmp.ge.f32.partialorder %v408, 0.0
    %vm1045 = vcmp.ge.f32.partialorder %v413, 0.0
    %vm1046 = vcmp.ge.f32.partialorder %v416, 0.0
    %vm1047 = vcmp.ge.f32.partialorder %v421, 0.0
    %vm1048 = vcmp.ge.f32.partialorder %v424, 0.0
    %vm1049 = vcmp.ge.f32.partialorder %v429, 0.0
    %vm1050 = vcmp.ge.f32.partialorder %v432, 0.0
    %vm1051 = vcmp.ge.f32.partialorder %v437, 0.0
    %vm1052 = vcmp.ge.f32.partialorder %v440, 0.0
    %vm1053 = vcmp.ge.f32.partialorder %v445, 0.0
    %vm1054 = vcmp.ge.f32.partialorder %v448, 0.0
    %vm1055 = vcmp.ge.f32.partialorder %v453, 0.0
    %vm1056 = vcmp.ge.f32.partialorder %v456, 0.0
    %vm1057 = vcmp.ge.f32.partialorder %v461, 0.0
    %vm1058 = vcmp.ge.f32.partialorder %v464, 0.0
    %vm1059 = vcmp.ge.f32.partialorder %v469, 0.0
    %vm1060 = vcmp.ge.f32.partialorder %v472, 0.0
    %vm1061 = vcmp.ge.f32.partialorder %v477, 0.0
    %vm1062 = vcmp.ge.f32.partialorder %v480, 0.0
    %vm1063 = vcmp.ge.f32.partialorder %v485, 0.0
    %vm1064 = vcmp.ge.f32.partialorder %v488, 0.0
    %vm1065 = vcmp.ge.f32.partialorder %v493, 0.0
    %vm1066 = vcmp.ge.f32.partialorder %v496, 0.0
    %vm1067 = vcmp.ge.f32.partialorder %v501, 0.0
    %vm1068 = vcmp.ge.f32.partialorder %v504, 0.0
    %vm1069 = vcmp.ge.f32.partialorder %v509, 0.0
    %vm1070 = vcmp.ge.f32.partialorder %v512, 0.0
    %vm1071 = vcmp.ge.f32.partialorder %v517, 0.0
    %vm1072 = vcmp.ge.f32.partialorder %v520, 0.0
    %vm1073 = vcmp.ge.f32.partialorder %v525, 0.0
    %vm1074 = vcmp.ge.f32.partialorder %v528, 0.0
    %vm1075 = vcmp.ge.f32.partialorder %v533, 0.0
    %vm1076 = vcmp.ge.f32.partialorder %v536, 0.0
    %vm1077 = vcmp.ge.f32.partialorder %v541, 0.0
    %vm1078 = vcmp.ge.f32.partialorder %v544, 0.0
    %vm1079 = vcmp.ge.f32.partialorder %v549, 0.0
    %vm1080 = vcmp.ge.f32.partialorder %v552, 0.0
    %vm1081 = vcmp.ge.f32.partialorder %v557, 0.0
    %vm1082 = vcmp.ge.f32.partialorder %v560, 0.0
    %vm1083 = vcmp.ge.f32.partialorder %v565, 0.0
    %vm1084 = vcmp.ge.f32.partialorder %v568, 0.0
    %vm1085 = vcmp.ge.f32.partialorder %v573, 0.0
    %vm1086 = vcmp.ge.f32.partialorder %v576, 0.0
    %vm1087 = vcmp.ge.f32.partialorder %v581, 0.0
    %vm1088 = vcmp.ge.f32.partialorder %v584, 0.0
    %vm1089 = vcmp.ge.f32.partialorder %v589, 0.0
    %vm1090 = vcmp.ge.f32.partialorder %v592, 0.0
    %vm1091 = vcmp.ge.f32.partialorder %v597, 0.0
    %vm1092 = vcmp.ge.f32.partialorder %v600, 0.0
    %vm1093 = vcmp.ge.f32.partialorder %v605, 0.0
    %vm1094 = vcmp.ge.f32.partialorder %v608, 0.0
    %vm1095 = vcmp.ge.f32.partialorder %v613, 0.0
    %vm1096 = vcmp.ge.f32.partialorder %v616, 0.0
    %vm1097 = vcmp.ge.f32.partialorder %v621, 0.0
    %vm1098 = vcmp.ge.f32.partialorder %v624, 0.0
    %vm1099 = vcmp.ge.f32.partialorder %v629, 0.0
    %vm1100 = vcmp.ge.f32.partialorder %v632, 0.0
    %vm1101 = vcmp.ge.f32.partialorder %v637, 0.0
    %vm1102 = vcmp.ge.f32.partialorder %v640, 0.0
    %vm1103 = vcmp.ge.f32.partialorder %v645, 0.0
    %vm1104 = vcmp.ge.f32.partialorder %v648, 0.0
    %vm1105 = vcmp.ge.f32.partialorder %v653, 0.0
    %vm1106 = vcmp.ge.f32.partialorder %v656, 0.0
    %v1107 = vmul.f32 %v405, 0.2
    %v1108 = vmul.f32 %v408, 0.2
    %v1109 = vmul.f32 %v413, 0.2
    %v1110 = vmul.f32 %v416, 0.2
    %v1111 = vmul.f32 %v421, 0.2
    %v1112 = vmul.f32 %v424, 0.2
    %v1113 = vmul.f32 %v429, 0.2
    %v1114 = vmul.f32 %v432, 0.2
    %v1115 = vmul.f32 %v437, 0.2
    %v1116 = vmul.f32 %v440, 0.2
    %v1117 = vmul.f32 %v445, 0.2
    %v1118 = vmul.f32 %v448, 0.2
    %v1119 = vmul.f32 %v453, 0.2
    %v1120 = vmul.f32 %v456, 0.2
    %v1121 = vmul.f32 %v461, 0.2
    %v1122 = vmul.f32 %v464, 0.2
    %v1123 = vmul.f32 %v469, 0.2
    %v1124 = vmul.f32 %v472, 0.2
    %v1125 = vmul.f32 %v477, 0.2
    %v1126 = vmul.f32 %v480, 0.2
    %v1127 = vmul.f32 %v485, 0.2
    %v1128 = vmul.f32 %v488, 0.2
    %v1129 = vmul.f32 %v493, 0.2
    %v1130 = vmul.f32 %v496, 0.2
    %v1131 = vmul.f32 %v501, 0.2
    %v1132 = vmul.f32 %v504, 0.2
    %v1133 = vmul.f32 %v509, 0.2
    %v1134 = vmul.f32 %v512, 0.2
    %v1135 = vmul.f32 %v517, 0.2
    %v1136 = vmul.f32 %v520, 0.2
    %v1137 = vmul.f32 %v525, 0.2
    %v1138 = vmul.f32 %v528, 0.2
    %v1139 = vmul.f32 %v533, 0.2
    %v1140 = vmul.f32 %v536, 0.2
    %v1141 = vmul.f32 %v541, 0.2
    %v1142 = vmul.f32 %v544, 0.2
    %v1143 = vmul.f32 %v549, 0.2
    %v1144 = vmul.f32 %v552, 0.2
    %v1145 = vmul.f32 %v557, 0.2
    %v1146 = vmul.f32 %v560, 0.2
    %v1147 = vmul.f32 %v565, 0.2
    %v1148 = vmul.f32 %v568, 0.2
    %v1149 = vmul.f32 %v573, 0.2
    %v1150 = vmul.f32 %v576, 0.2
    %v1151 = vmul.f32 %v581, 0.2
    %v1152 = vmul.f32 %v584, 0.2
    %v1153 = vmul.f32 %v589, 0.2
    %v1154 = vmul.f32 %v592, 0.2
    %v1155 = vmul.f32 %v597, 0.2
    %v1156 = vmul.f32 %v600, 0.2
    %v1157 = vmul.f32 %v605, 0.2
    %v1158 = vmul.f32 %v608, 0.2
    %v1159 = vmul.f32 %v613, 0.2
    %v1160 = vmul.f32 %v616, 0.2
    %v1161 = vmul.f32 %v621, 0.2
    %v1162 = vmul.f32 %v624, 0.2
    %v1163 = vmul.f32 %v629, 0.2
    %v1164 = vmul.f32 %v632, 0.2
    %v1165 = vmul.f32 %v637, 0.2
    %v1166 = vmul.f32 %v640, 0.2
    %v1167 = vmul.f32 %v645, 0.2
    %v1168 = vmul.f32 %v648, 0.2
    %v1169 = vmul.f32 %v653, 0.2
    %v1170 = vmul.f32 %v656, 0.2
    %v1171 = vsel %vm1043, %v405, %v1107
    %v1172 = vsel %vm1044, %v408, %v1108
    %v1173 = vsel %vm1045, %v413, %v1109
    %v1174 = vsel %vm1046, %v416, %v1110
    %v1175 = vsel %vm1047, %v421, %v1111
    %v1176 = vsel %vm1048, %v424, %v1112
    %v1177 = vsel %vm1049, %v429, %v1113
    %v1178 = vsel %vm1050, %v432, %v1114
    %v1179 = vsel %vm1051, %v437, %v1115
    %v1180 = vsel %vm1052, %v440, %v1116
    %v1181 = vsel %vm1053, %v445, %v1117
    %v1182 = vsel %vm1054, %v448, %v1118
    %v1183 = vsel %vm1055, %v453, %v1119
    %v1184 = vsel %vm1056, %v456, %v1120
    %v1185 = vsel %vm1057, %v461, %v1121
    %v1186 = vsel %vm1058, %v464, %v1122
    %v1187 = vsel %vm1059, %v469, %v1123
    %v1188 = vsel %vm1060, %v472, %v1124
    %v1189 = vsel %vm1061, %v477, %v1125
    %v1190 = vsel %vm1062, %v480, %v1126
    %v1191 = vsel %vm1063, %v485, %v1127
    %v1192 = vsel %vm1064, %v488, %v1128
    %v1193 = vsel %vm1065, %v493, %v1129
    %v1194 = vsel %vm1066, %v496, %v1130
    %v1195 = vsel %vm1067, %v501, %v1131
    %v1196 = vsel %vm1068, %v504, %v1132
    %v1197 = vsel %vm1069, %v509, %v1133
    %v1198 = vsel %vm1070, %v512, %v1134
    %v1199 = vsel %vm1071, %v517, %v1135
    %v1200 = vsel %vm1072, %v520, %v1136
    %v1201 = vsel %vm1073, %v525, %v1137
    %v1202 = vsel %vm1074, %v528, %v1138
    %v1203 = vsel %vm1075, %v533, %v1139
    %v1204 = vsel %vm1076, %v536, %v1140
    %v1205 = vsel %vm1077, %v541, %v1141
    %v1206 = vsel %vm1078, %v544, %v1142
    %v1207 = vsel %vm1079, %v549, %v1143
    %v1208 = vsel %vm1080, %v552, %v1144
    %v1209 = vsel %vm1081, %v557, %v1145
    %v1210 = vsel %vm1082, %v560, %v1146
    %v1211 = vsel %vm1083, %v565, %v1147
    %v1212 = vsel %vm1084, %v568, %v1148
    %v1213 = vsel %vm1085, %v573, %v1149
    %v1214 = vsel %vm1086, %v576, %v1150
    %v1215 = vsel %vm1087, %v581, %v1151
    %v1216 = vsel %vm1088, %v584, %v1152
    %v1217 = vsel %vm1089, %v589, %v1153
    %v1218 = vsel %vm1090, %v592, %v1154
    %v1219 = vsel %vm1091, %v597, %v1155
    %v1220 = vsel %vm1092, %v600, %v1156
    %v1221 = vsel %vm1093, %v605, %v1157
    %v1222 = vsel %vm1094, %v608, %v1158
    %v1223 = vsel %vm1095, %v613, %v1159
    %v1224 = vsel %vm1096, %v616, %v1160
    %v1225 = vsel %vm1097, %v621, %v1161
    %v1226 = vsel %vm1098, %v624, %v1162
    %v1227 = vsel %vm1099, %v629, %v1163
    %v1228 = vsel %vm1100, %v632, %v1164
    %v1229 = vsel %vm1101, %v637, %v1165
    %v1230 = vsel %vm1102, %v640, %v1166
    %v1231 = vsel %vm1103, %v645, %v1167
    %v1232 = vsel %vm1104, %v648, %v1168
    %v1233 = vsel %vm1105, %v653, %v1169
    %v1234 = vsel %vm1106, %v656, %v1170
    %1299 = vrot.lane.b32.xlu0 %v916, 64
    %v1300 = vpop.permute.xlu0 %1299
    %1301 = vrot.lane.b32.xlu0 %v918, 64
    %v1302 = vpop.permute.xlu0 %1301
    %1303 = vrot.lane.b32.xlu0 %v920, 64
    %v1304 = vpop.permute.xlu0 %1303
    %1305 = vrot.lane.b32.xlu0 %v922, 64
    %v1306 = vpop.permute.xlu0 %1305
    %1307 = vrot.lane.b32.xlu0 %v924, 64
    %v1308 = vpop.permute.xlu0 %1307
    %1309 = vrot.lane.b32.xlu0 %v926, 64
    %v1310 = vpop.permute.xlu0 %1309
    %1311 = vrot.lane.b32.xlu0 %v928, 64
    %v1312 = vpop.permute.xlu0 %1311
    %1313 = vrot.lane.b32.xlu0 %v930, 64
    %v1314 = vpop.permute.xlu0 %1313
    %1315 = vrot.lane.b32.xlu0 %v932, 64
    %v1316 = vpop.permute.xlu0 %1315
    %1317 = vrot.lane.b32.xlu0 %v934, 64
    %v1318 = vpop.permute.xlu0 %1317
    %1319 = vrot.lane.b32.xlu0 %v936, 64
    %v1320 = vpop.permute.xlu0 %1319
    %1321 = vrot.lane.b32.xlu0 %v938, 64
    %v1322 = vpop.permute.xlu0 %1321
    %1323 = vrot.lane.b32.xlu0 %v940, 64
    %v1324 = vpop.permute.xlu0 %1323
    %1325 = vrot.lane.b32.xlu0 %v942, 64
    %v1326 = vpop.permute.xlu0 %1325
    %1327 = vrot.lane.b32.xlu0 %v944, 64
    %v1328 = vpop.permute.xlu0 %1327
    %1329 = vrot.lane.b32.xlu0 %v946, 64
    %v1330 = vpop.permute.xlu0 %1329
    %1331 = vrot.lane.b32.xlu0 %v948, 64
    %v1332 = vpop.permute.xlu0 %1331
    %1333 = vrot.lane.b32.xlu0 %v950, 64
    %v1334 = vpop.permute.xlu0 %1333
    %1335 = vrot.lane.b32.xlu0 %v952, 64
    %v1336 = vpop.permute.xlu0 %1335
    %1337 = vrot.lane.b32.xlu0 %v954, 64
    %v1338 = vpop.permute.xlu0 %1337
    %1339 = vrot.lane.b32.xlu0 %v956, 64
    %v1340 = vpop.permute.xlu0 %1339
    %1341 = vrot.lane.b32.xlu0 %v958, 64
    %v1342 = vpop.permute.xlu0 %1341
    %1343 = vrot.lane.b32.xlu0 %v960, 64
    %v1344 = vpop.permute.xlu0 %1343
    %1345 = vrot.lane.b32.xlu0 %v962, 64
    %v1346 = vpop.permute.xlu0 %1345
    %1347 = vrot.lane.b32.xlu0 %v964, 64
    %v1348 = vpop.permute.xlu0 %1347
    %1349 = vrot.lane.b32.xlu0 %v966, 64
    %v1350 = vpop.permute.xlu0 %1349
    %1351 = vrot.lane.b32.xlu0 %v968, 64
    %v1352 = vpop.permute.xlu0 %1351
    %1353 = vrot.lane.b32.xlu0 %v970, 64
    %v1354 = vpop.permute.xlu0 %1353
    %1355 = vrot.lane.b32.xlu0 %v972, 64
    %v1356 = vpop.permute.xlu0 %1355
    %1357 = vrot.lane.b32.xlu0 %v974, 64
    %v1358 = vpop.permute.xlu0 %1357
    %1359 = vrot.lane.b32.xlu0 %v976, 64
    %v1360 = vpop.permute.xlu0 %1359
    %1361 = vrot.lane.b32.xlu0 %v978, 64
    %v1362 = vpop.permute.xlu0 %1361
    %1363 = vrot.lane.b32.xlu0 %v980, 64
    %v1364 = vpop.permute.xlu0 %1363
    %1365 = vrot.lane.b32.xlu0 %v982, 64
    %v1366 = vpop.permute.xlu0 %1365
    %1367 = vrot.lane.b32.xlu0 %v984, 64
    %v1368 = vpop.permute.xlu0 %1367
    %1369 = vrot.lane.b32.xlu0 %v986, 64
    %v1370 = vpop.permute.xlu0 %1369
    %1371 = vrot.lane.b32.xlu0 %v988, 64
    %v1372 = vpop.permute.xlu0 %1371
    %1373 = vrot.lane.b32.xlu0 %v990, 64
    %v1374 = vpop.permute.xlu0 %1373
    %1375 = vrot.lane.b32.xlu0 %v992, 64
    %v1376 = vpop.permute.xlu0 %1375
    %1377 = vrot.lane.b32.xlu0 %v994, 64
    %v1378 = vpop.permute.xlu0 %1377
    %1379 = vrot.lane.b32.xlu0 %v996, 64
    %v1380 = vpop.permute.xlu0 %1379
    %1381 = vrot.lane.b32.xlu0 %v998, 64
    %v1382 = vpop.permute.xlu0 %1381
    %1383 = vrot.lane.b32.xlu0 %v1000, 64
    %v1384 = vpop.permute.xlu0 %1383
    %1385 = vrot.lane.b32.xlu0 %v1002, 64
    %v1386 = vpop.permute.xlu0 %1385
    %1387 = vrot.lane.b32.xlu0 %v1004, 64
    %v1388 = vpop.permute.xlu0 %1387
    %1389 = vrot.lane.b32.xlu0 %v1006, 64
    %v1390 = vpop.permute.xlu0 %1389
    %1391 = vrot.lane.b32.xlu0 %v1008, 64
    %v1392 = vpop.permute.xlu0 %1391
    %1393 = vrot.lane.b32.xlu0 %v1010, 64
    %v1394 = vpop.permute.xlu0 %1393
    %1395 = vrot.lane.b32.xlu0 %v1012, 64
    %v1396 = vpop.permute.xlu0 %1395
    %1397 = vrot.lane.b32.xlu0 %v1014, 64
    %v1398 = vpop.permute.xlu0 %1397
    %1399 = vrot.lane.b32.xlu0 %v1016, 64
    %v1400 = vpop.permute.xlu0 %1399
    %1401 = vrot.lane.b32.xlu0 %v1018, 64
    %v1402 = vpop.permute.xlu0 %1401
    %1403 = vrot.lane.b32.xlu0 %v1020, 64
    %v1404 = vpop.permute.xlu0 %1403
    %1405 = vrot.lane.b32.xlu0 %v1022, 64
    %v1406 = vpop.permute.xlu0 %1405
    %1407 = vrot.lane.b32.xlu0 %v1024, 64
    %v1408 = vpop.permute.xlu0 %1407
    %1409 = vrot.lane.b32.xlu0 %v1026, 64
    %v1410 = vpop.permute.xlu0 %1409
    %1411 = vrot.lane.b32.xlu0 %v1028, 64
    %v1412 = vpop.permute.xlu0 %1411
    %1413 = vrot.lane.b32.xlu0 %v1030, 64
    %v1414 = vpop.permute.xlu0 %1413
    %1415 = vrot.lane.b32.xlu0 %v1032, 64
    %v1416 = vpop.permute.xlu0 %1415
    %1417 = vrot.lane.b32.xlu0 %v1034, 64
    %v1418 = vpop.permute.xlu0 %1417
    %1419 = vrot.lane.b32.xlu0 %v1036, 64
    %v1420 = vpop.permute.xlu0 %1419
    %1421 = vrot.lane.b32.xlu0 %v1038, 64
    %v1422 = vpop.permute.xlu0 %1421
    %1423 = vrot.lane.b32.xlu0 %v1040, 64
    %v1424 = vpop.permute.xlu0 %1423
    %1425 = vrot.lane.b32.xlu0 %v1042, 64
    %v1426 = vpop.permute.xlu0 %1425
    %v1491 = vmul.f32 %v1171, %v1300
    %v1492 = vmul.f32 %v1172, %v1302
    %v1493 = vmul.f32 %v1173, %v1304
    %v1494 = vmul.f32 %v1174, %v1306
    %v1495 = vmul.f32 %v1175, %v1308
    %v1496 = vmul.f32 %v1176, %v1310
    %v1497 = vmul.f32 %v1177, %v1312
    %v1498 = vmul.f32 %v1178, %v1314
    %v1499 = vmul.f32 %v1179, %v1316
    %v1500 = vmul.f32 %v1180, %v1318
    %v1501 = vmul.f32 %v1181, %v1320
    %v1502 = vmul.f32 %v1182, %v1322
    %v1503 = vmul.f32 %v1183, %v1324
    %v1504 = vmul.f32 %v1184, %v1326
    %v1505 = vmul.f32 %v1185, %v1328
    %v1506 = vmul.f32 %v1186, %v1330
    %v1507 = vmul.f32 %v1187, %v1332
    %v1508 = vmul.f32 %v1188, %v1334
    %v1509 = vmul.f32 %v1189, %v1336
    %v1510 = vmul.f32 %v1190, %v1338
    %v1511 = vmul.f32 %v1191, %v1340
    %v1512 = vmul.f32 %v1192, %v1342
    %v1513 = vmul.f32 %v1193, %v1344
    %v1514 = vmul.f32 %v1194, %v1346
    %v1515 = vmul.f32 %v1195, %v1348
    %v1516 = vmul.f32 %v1196, %v1350
    %v1517 = vmul.f32 %v1197, %v1352
    %v1518 = vmul.f32 %v1198, %v1354
    %v1519 = vmul.f32 %v1199, %v1356
    %v1520 = vmul.f32 %v1200, %v1358
    %v1521 = vmul.f32 %v1201, %v1360
    %v1522 = vmul.f32 %v1202, %v1362
    %v1523 = vmul.f32 %v1203, %v1364
    %v1524 = vmul.f32 %v1204, %v1366
    %v1525 = vmul.f32 %v1205, %v1368
    %v1526 = vmul.f32 %v1206, %v1370
    %v1527 = vmul.f32 %v1207, %v1372
    %v1528 = vmul.f32 %v1208, %v1374
    %v1529 = vmul.f32 %v1209, %v1376
    %v1530 = vmul.f32 %v1210, %v1378
    %v1531 = vmul.f32 %v1211, %v1380
    %v1532 = vmul.f32 %v1212, %v1382
    %v1533 = vmul.f32 %v1213, %v1384
    %v1534 = vmul.f32 %v1214, %v1386
    %v1535 = vmul.f32 %v1215, %v1388
    %v1536 = vmul.f32 %v1216, %v1390
    %v1537 = vmul.f32 %v1217, %v1392
    %v1538 = vmul.f32 %v1218, %v1394
    %v1539 = vmul.f32 %v1219, %v1396
    %v1540 = vmul.f32 %v1220, %v1398
    %v1541 = vmul.f32 %v1221, %v1400
    %v1542 = vmul.f32 %v1222, %v1402
    %v1543 = vmul.f32 %v1223, %v1404
    %v1544 = vmul.f32 %v1224, %v1406
    %v1545 = vmul.f32 %v1225, %v1408
    %v1546 = vmul.f32 %v1226, %v1410
    %v1547 = vmul.f32 %v1227, %v1412
    %v1548 = vmul.f32 %v1228, %v1414
    %v1549 = vmul.f32 %v1229, %v1416
    %v1550 = vmul.f32 %v1230, %v1418
    %v1551 = vmul.f32 %v1231, %v1420
    %v1552 = vmul.f32 %v1232, %v1422
    %v1553 = vmul.f32 %v1233, %v1424
    %v1554 = vmul.f32 %v1234, %v1426
    %v1555 = vpack.c.bf16 %v1492, %v1491
    %v1556 = vpack.c.bf16 %v1494, %v1493
    %v1557 = vpack.c.bf16 %v1496, %v1495
    %v1558 = vpack.c.bf16 %v1498, %v1497
    %v1559 = vpack.c.bf16 %v1500, %v1499
    %v1560 = vpack.c.bf16 %v1502, %v1501
    %v1561 = vpack.c.bf16 %v1504, %v1503
    %v1562 = vpack.c.bf16 %v1506, %v1505
    %v1563 = vpack.c.bf16 %v1508, %v1507
    %v1564 = vpack.c.bf16 %v1510, %v1509
    %v1565 = vpack.c.bf16 %v1512, %v1511
    %v1566 = vpack.c.bf16 %v1514, %v1513
    %v1567 = vpack.c.bf16 %v1516, %v1515
    %v1568 = vpack.c.bf16 %v1518, %v1517
    %v1569 = vpack.c.bf16 %v1520, %v1519
    %v1570 = vpack.c.bf16 %v1522, %v1521
    %v1571 = vpack.c.bf16 %v1524, %v1523
    %v1572 = vpack.c.bf16 %v1526, %v1525
    %v1573 = vpack.c.bf16 %v1528, %v1527
    %v1574 = vpack.c.bf16 %v1530, %v1529
    %v1575 = vpack.c.bf16 %v1532, %v1531
    %v1576 = vpack.c.bf16 %v1534, %v1533
    %v1577 = vpack.c.bf16 %v1536, %v1535
    %v1578 = vpack.c.bf16 %v1538, %v1537
    %v1579 = vpack.c.bf16 %v1540, %v1539
    %v1580 = vpack.c.bf16 %v1542, %v1541
    %v1581 = vpack.c.bf16 %v1544, %v1543
    %v1582 = vpack.c.bf16 %v1546, %v1545
    %v1583 = vpack.c.bf16 %v1548, %v1547
    %v1584 = vpack.c.bf16 %v1550, %v1549
    %v1585 = vpack.c.bf16 %v1552, %v1551
    %v1586 = vpack.c.bf16 %v1554, %v1553
    %v1619 = vunpack.c.l.b16 %v1555
    %v1620 = vunpack.c.h.b16 %v1555
    %v1621 = vunpack.c.l.b16 %v1556
    %v1622 = vunpack.c.h.b16 %v1556
    %v1623 = vunpack.c.l.b16 %v1557
    %v1624 = vunpack.c.h.b16 %v1557
    %v1625 = vunpack.c.l.b16 %v1558
    %v1626 = vunpack.c.h.b16 %v1558
    %v1627 = vunpack.c.l.b16 %v1559
    %v1628 = vunpack.c.h.b16 %v1559
    %v1629 = vunpack.c.l.b16 %v1560
    %v1630 = vunpack.c.h.b16 %v1560
    %v1631 = vunpack.c.l.b16 %v1561
    %v1632 = vunpack.c.h.b16 %v1561
    %v1633 = vunpack.c.l.b16 %v1562
    %v1634 = vunpack.c.h.b16 %v1562
    %v1635 = vunpack.c.l.b16 %v1563
    %v1636 = vunpack.c.h.b16 %v1563
    %v1637 = vunpack.c.l.b16 %v1564
    %v1638 = vunpack.c.h.b16 %v1564
    %v1639 = vunpack.c.l.b16 %v1565
    %v1640 = vunpack.c.h.b16 %v1565
    %v1641 = vunpack.c.l.b16 %v1566
    %v1642 = vunpack.c.h.b16 %v1566
    %v1643 = vunpack.c.l.b16 %v1567
    %v1644 = vunpack.c.h.b16 %v1567
    %v1645 = vunpack.c.l.b16 %v1568
    %v1646 = vunpack.c.h.b16 %v1568
    %v1647 = vunpack.c.l.b16 %v1569
    %v1648 = vunpack.c.h.b16 %v1569
    %v1649 = vunpack.c.l.b16 %v1570
    %v1650 = vunpack.c.h.b16 %v1570
    %v1651 = vunpack.c.l.b16 %v1571
    %v1652 = vunpack.c.h.b16 %v1571
    %v1653 = vunpack.c.l.b16 %v1572
    %v1654 = vunpack.c.h.b16 %v1572
    %v1655 = vunpack.c.l.b16 %v1573
    %v1656 = vunpack.c.h.b16 %v1573
    %v1657 = vunpack.c.l.b16 %v1574
    %v1658 = vunpack.c.h.b16 %v1574
    %v1659 = vunpack.c.l.b16 %v1575
    %v1660 = vunpack.c.h.b16 %v1575
    %v1661 = vunpack.c.l.b16 %v1576
    %v1662 = vunpack.c.h.b16 %v1576
    %v1663 = vunpack.c.l.b16 %v1577
    %v1664 = vunpack.c.h.b16 %v1577
    %v1665 = vunpack.c.l.b16 %v1578
    %v1666 = vunpack.c.h.b16 %v1578
    %v1667 = vunpack.c.l.b16 %v1579
    %v1668 = vunpack.c.h.b16 %v1579
    %v1669 = vunpack.c.l.b16 %v1580
    %v1670 = vunpack.c.h.b16 %v1580
    %v1671 = vunpack.c.l.b16 %v1581
    %v1672 = vunpack.c.h.b16 %v1581
    %v1673 = vunpack.c.l.b16 %v1582
    %v1674 = vunpack.c.h.b16 %v1582
    %v1675 = vunpack.c.l.b16 %v1583
    %v1676 = vunpack.c.h.b16 %v1583
    %v1677 = vunpack.c.l.b16 %v1584
    %v1678 = vunpack.c.h.b16 %v1584
    %v1679 = vunpack.c.l.b16 %v1585
    %v1680 = vunpack.c.h.b16 %v1585
    %v1681 = vunpack.c.l.b16 %v1586
    %v1682 = vunpack.c.h.b16 %v1586
    %v1683 = vpack.c.b16 %v1619, %v1619
    %v1684 = vpack.c.b16 %v1620, %v1620
    %v1685 = vpack.c.b16 %v1621, %v1621
    %v1686 = vpack.c.b16 %v1622, %v1622
    %v1687 = vpack.c.b16 %v1623, %v1623
    %v1688 = vpack.c.b16 %v1624, %v1624
    %v1689 = vpack.c.b16 %v1625, %v1625
    %v1690 = vpack.c.b16 %v1626, %v1626
    %v1691 = vpack.c.b16 %v1627, %v1627
    %v1692 = vpack.c.b16 %v1628, %v1628
    %v1693 = vpack.c.b16 %v1629, %v1629
    %v1694 = vpack.c.b16 %v1630, %v1630
    %v1695 = vpack.c.b16 %v1631, %v1631
    %v1696 = vpack.c.b16 %v1632, %v1632
    %v1697 = vpack.c.b16 %v1633, %v1633
    %v1698 = vpack.c.b16 %v1634, %v1634
    %v1699 = vpack.c.b16 %v1635, %v1635
    %v1700 = vpack.c.b16 %v1636, %v1636
    %v1701 = vpack.c.b16 %v1637, %v1637
    %v1702 = vpack.c.b16 %v1638, %v1638
    %v1703 = vpack.c.b16 %v1639, %v1639
    %v1704 = vpack.c.b16 %v1640, %v1640
    %v1705 = vpack.c.b16 %v1641, %v1641
    %v1706 = vpack.c.b16 %v1642, %v1642
    %v1707 = vpack.c.b16 %v1643, %v1643
    %v1708 = vpack.c.b16 %v1644, %v1644
    %v1709 = vpack.c.b16 %v1645, %v1645
    %v1710 = vpack.c.b16 %v1646, %v1646
    %v1711 = vpack.c.b16 %v1647, %v1647
    %v1712 = vpack.c.b16 %v1648, %v1648
    %v1713 = vpack.c.b16 %v1649, %v1649
    %v1714 = vpack.c.b16 %v1650, %v1650
    %v1715 = vpack.c.b16 %v1651, %v1651
    %v1716 = vpack.c.b16 %v1652, %v1652
    %v1717 = vpack.c.b16 %v1653, %v1653
    %v1718 = vpack.c.b16 %v1654, %v1654
    %v1719 = vpack.c.b16 %v1655, %v1655
    %v1720 = vpack.c.b16 %v1656, %v1656
    %v1721 = vpack.c.b16 %v1657, %v1657
    %v1722 = vpack.c.b16 %v1658, %v1658
    %v1723 = vpack.c.b16 %v1659, %v1659
    %v1724 = vpack.c.b16 %v1660, %v1660
    %v1725 = vpack.c.b16 %v1661, %v1661
    %v1726 = vpack.c.b16 %v1662, %v1662
    %v1727 = vpack.c.b16 %v1663, %v1663
    %v1728 = vpack.c.b16 %v1664, %v1664
    %v1729 = vpack.c.b16 %v1665, %v1665
    %v1730 = vpack.c.b16 %v1666, %v1666
    %v1731 = vpack.c.b16 %v1667, %v1667
    %v1732 = vpack.c.b16 %v1668, %v1668
    %v1733 = vpack.c.b16 %v1669, %v1669
    %v1734 = vpack.c.b16 %v1670, %v1670
    %v1735 = vpack.c.b16 %v1671, %v1671
    %v1736 = vpack.c.b16 %v1672, %v1672
    %v1737 = vpack.c.b16 %v1673, %v1673
    %v1738 = vpack.c.b16 %v1674, %v1674
    %v1739 = vpack.c.b16 %v1675, %v1675
    %v1740 = vpack.c.b16 %v1676, %v1676
    %v1741 = vpack.c.b16 %v1677, %v1677
    %v1742 = vpack.c.b16 %v1678, %v1678
    %v1743 = vpack.c.b16 %v1679, %v1679
    %v1744 = vpack.c.b16 %v1680, %v1680
    %v1745 = vpack.c.b16 %v1681, %v1681
    %v1746 = vpack.c.b16 %v1682, %v1682
    %vm1811 = vcmask 257024
    %1812 = vst.msk [vmem:[%s3] sm:$0xf] %vm1811, %v1683
    %1813 = vst.msk [vmem:[%s3 + $0x4] sm:$0xf] %vm1811, %v1684
    %1814 = vst.msk [vmem:[%s3 + $0x8] sm:$0xf] %vm1811, %v1685
    %1815 = vst.msk [vmem:[%s3 + $0xc] sm:$0xf] %vm1811, %v1686
    %1816 = vst.msk [vmem:[%s3 + $0x10] sm:$0xf] %vm1811, %v1687
    %1817 = vst.msk [vmem:[%s3 + $0x14] sm:$0xf] %vm1811, %v1688
    %1818 = vst.msk [vmem:[%s3 + $0x18] sm:$0xf] %vm1811, %v1689
    %1819 = vst.msk [vmem:[%s3 + $0x1c] sm:$0xf] %vm1811, %v1690
    %1820 = vst.msk [vmem:[%s3 + $0x20] sm:$0xf] %vm1811, %v1691
    %1821 = vst.msk [vmem:[%s3 + $0x24] sm:$0xf] %vm1811, %v1692
    %1822 = vst.msk [vmem:[%s3 + $0x28] sm:$0xf] %vm1811, %v1693
    %1823 = vst.msk [vmem:[%s3 + $0x2c] sm:$0xf] %vm1811, %v1694
    %1824 = vst.msk [vmem:[%s3 + $0x30] sm:$0xf] %vm1811, %v1695
    %1825 = vst.msk [vmem:[%s3 + $0x34] sm:$0xf] %vm1811, %v1696
    %1826 = vst.msk [vmem:[%s3 + $0x38] sm:$0xf] %vm1811, %v1697
    %1827 = vst.msk [vmem:[%s3 + $0x3c] sm:$0xf] %vm1811, %v1698
    %1828 = vst.msk [vmem:[%s3 + $0x40] sm:$0xf] %vm1811, %v1699
    %1829 = vst.msk [vmem:[%s3 + $0x44] sm:$0xf] %vm1811, %v1700
    %1830 = vst.msk [vmem:[%s3 + $0x48] sm:$0xf] %vm1811, %v1701
    %1831 = vst.msk [vmem:[%s3 + $0x4c] sm:$0xf] %vm1811, %v1702
    %1832 = vst.msk [vmem:[%s3 + $0x50] sm:$0xf] %vm1811, %v1703
    %1833 = vst.msk [vmem:[%s3 + $0x54] sm:$0xf] %vm1811, %v1704
    %1834 = vst.msk [vmem:[%s3 + $0x58] sm:$0xf] %vm1811, %v1705
    %1835 = vst.msk [vmem:[%s3 + $0x5c] sm:$0xf] %vm1811, %v1706
    %1836 = vst.msk [vmem:[%s3 + $0x60] sm:$0xf] %vm1811, %v1707
    %1837 = vst.msk [vmem:[%s3 + $0x64] sm:$0xf] %vm1811, %v1708
    %1838 = vst.msk [vmem:[%s3 + $0x68] sm:$0xf] %vm1811, %v1709
    %1839 = vst.msk [vmem:[%s3 + $0x6c] sm:$0xf] %vm1811, %v1710
    %1840 = vst.msk [vmem:[%s3 + $0x70] sm:$0xf] %vm1811, %v1711
    %1841 = vst.msk [vmem:[%s3 + $0x74] sm:$0xf] %vm1811, %v1712
    %1842 = vst.msk [vmem:[%s3 + $0x78] sm:$0xf] %vm1811, %v1713
    %1843 = vst.msk [vmem:[%s3 + $0x7c] sm:$0xf] %vm1811, %v1714
    %1844 = vst.msk [vmem:[%s3 + $0x80] sm:$0xf] %vm1811, %v1715
    %1845 = vst.msk [vmem:[%s3 + $0x84] sm:$0xf] %vm1811, %v1716
    %1846 = vst.msk [vmem:[%s3 + $0x88] sm:$0xf] %vm1811, %v1717
    %1847 = vst.msk [vmem:[%s3 + $0x8c] sm:$0xf] %vm1811, %v1718
    %1848 = vst.msk [vmem:[%s3 + $0x90] sm:$0xf] %vm1811, %v1719
    %1849 = vst.msk [vmem:[%s3 + $0x94] sm:$0xf] %vm1811, %v1720
    %1850 = vst.msk [vmem:[%s3 + $0x98] sm:$0xf] %vm1811, %v1721
    %1851 = vst.msk [vmem:[%s3 + $0x9c] sm:$0xf] %vm1811, %v1722
    %1852 = vst.msk [vmem:[%s3 + $0xa0] sm:$0xf] %vm1811, %v1723
    %1853 = vst.msk [vmem:[%s3 + $0xa4] sm:$0xf] %vm1811, %v1724
    %1854 = vst.msk [vmem:[%s3 + $0xa8] sm:$0xf] %vm1811, %v1725
    %1855 = vst.msk [vmem:[%s3 + $0xac] sm:$0xf] %vm1811, %v1726
    %1856 = vst.msk [vmem:[%s3 + $0xb0] sm:$0xf] %vm1811, %v1727
    %1857 = vst.msk [vmem:[%s3 + $0xb4] sm:$0xf] %vm1811, %v1728
    %1858 = vst.msk [vmem:[%s3 + $0xb8] sm:$0xf] %vm1811, %v1729
    %1859 = vst.msk [vmem:[%s3 + $0xbc] sm:$0xf] %vm1811, %v1730
    %1860 = vst.msk [vmem:[%s3 + $0xc0] sm:$0xf] %vm1811, %v1731
    %1861 = vst.msk [vmem:[%s3 + $0xc4] sm:$0xf] %vm1811, %v1732
    %1862 = vst.msk [vmem:[%s3 + $0xc8] sm:$0xf] %vm1811, %v1733
    %1863 = vst.msk [vmem:[%s3 + $0xcc] sm:$0xf] %vm1811, %v1734
    %1864 = vst.msk [vmem:[%s3 + $0xd0] sm:$0xf] %vm1811, %v1735
    %1865 = vst.msk [vmem:[%s3 + $0xd4] sm:$0xf] %vm1811, %v1736
    %1866 = vst.msk [vmem:[%s3 + $0xd8] sm:$0xf] %vm1811, %v1737
    %1867 = vst.msk [vmem:[%s3 + $0xdc] sm:$0xf] %vm1811, %v1738
    %1868 = vst.msk [vmem:[%s3 + $0xe0] sm:$0xf] %vm1811, %v1739
    %1869 = vst.msk [vmem:[%s3 + $0xe4] sm:$0xf] %vm1811, %v1740
    %1870 = vst.msk [vmem:[%s3 + $0xe8] sm:$0xf] %vm1811, %v1741
    %1871 = vst.msk [vmem:[%s3 + $0xec] sm:$0xf] %vm1811, %v1742
    %1872 = vst.msk [vmem:[%s3 + $0xf0] sm:$0xf] %vm1811, %v1743
    %1873 = vst.msk [vmem:[%s3 + $0xf4] sm:$0xf] %vm1811, %v1744
    %1874 = vst.msk [vmem:[%s3 + $0xf8] sm:$0xf] %vm1811, %v1745
    %1875 = vst.msk [vmem:[%s3 + $0xfc] sm:$0xf] %vm1811, %v1746
    // Predicated region
    $region22: #{tpu_custom_call.1} parent=1 // pred_check
      _
    $region23: #{tpu_custom_call.1} parent=1 // pred_check_branch
      %1877 = sbr.rel (0) target = $region25
    $region24: #{tpu_custom_call.1} parent=1 // pred_region
      _
    $region25: #{tpu_custom_call.1} parent=1 // pred_fallthru
      _
    // Predicated region
    $region26: #{tpu_custom_call.1} parent=1 // pred_check
      _
    $region27: #{tpu_custom_call.1} parent=1 // pred_check_branch
      %1879 = sbr.rel (0) target = $region29
    $region28: #{tpu_custom_call.1} parent=1 // pred_region
      _
    $region29: #{tpu_custom_call.1} parent=1 // pred_fallthru
      _
    %1880 = vsyncpa [#allocation3], 1
    %1881 = vsyncpa [#allocation5], 1

</llo_original>
